<compile_context>
chip_gen: v5e
topology: v5e:2x2
jax: 0.10.0
libtpu: 0.0.40
codegen_flags: <defaults>
</compile_context>

<pallas_src>
import functools
import math

import jax
import jax.numpy as jnp
from jax.experimental import pallas as pl
from jax.experimental.pallas import tpu as pltpu


# ----------------------------- Pallas kernel ------------------------------- #
def _layer_norm(z, gamma, beta, eps=1e-5):
    # Single-pass statistics: sum and sum-of-squares (independent lane reductions).
    inv_n = 1.0 / z.shape[-1]
    mu = jnp.sum(z, axis=-1, keepdims=True) * inv_n
    ex2 = jnp.sum(z * z, axis=-1, keepdims=True) * inv_n
    var = ex2 - mu * mu
    return (z - mu) * jax.lax.rsqrt(var + eps) * gamma + beta


def encoder_stack_kernel(
    x_ref,                            # (Bb, S, D)  input activations (read at layer 0)
    wqkv_ref,                         # (1, D, 3D)  fused QKV weight, Q pre-scaled (bf16)
    wo_ref, bo_ref,                   # (1, D, D) bf16 ; (1, 1, D) f32
    g1_ref, b1n_ref,                  # LayerNorm1 gamma/beta (1, 1, D) f32
    w1_ref, b1_ref,                   # (1, D, H) bf16 ; (1, 1, H) f32
    w2_ref, b2_ref,                   # (1, H, D) bf16 ; (1, 1, D) f32
    g2_ref, b2n_ref,                  # LayerNorm2 gamma/beta (1, 1, D) f32
    o_ref,                            # (Bb, S, D)  resident activations / final output
    *, nheads: int, d_k: int, Bb: int, S: int, D: int, H: int,
):
    layer = pl.program_id(1)          # layer axis is the minor ("arbitrary") grid axis
    cdt = wqkv_ref.dtype              # bf16 compute dtype for MXU operands
    BS = Bb * S

    # Layer 0: seed the resident output block with the input activations.
    @pl.when(layer == 0)
    def _():
        o_ref[...] = x_ref[...]

    x = o_ref[...].reshape(BS, D)     # f32 resident activations for this batch block
    xc = x.astype(cdt)

    # ---- fused QKV projection (no bias); one wide bf16 cast of the result ----
    qkv = jnp.dot(xc, wqkv_ref[0], preferred_element_type=jnp.float32)   # (BS, 3D) f32
    qkvc = qkv.astype(cdt)                                                # single cast

    # ---- multi-head attention; heads folded into the Wo accumulation ----
    # TODO(synk): src_mask (key padding mask) and dropout paths are not wired in;
    # matches the PyTorch module called with src_mask=None and dropout=None.
    attn = None
    for h in range(nheads):
        lo = h * d_k
        qh = qkvc[:, lo:lo + d_k].reshape(Bb, S, d_k)              # scale pre-folded
        kh = qkvc[:, D + lo:D + lo + d_k].reshape(Bb, S, d_k)
        vh = qkvc[:, 2 * D + lo:2 * D + lo + d_k].reshape(Bb, S, d_k)

        s = jnp.einsum("bqd,bkd->bqk", qh, kh,
                       preferred_element_type=jnp.float32)          # (Bb,S,S) f32
        s = s - jnp.max(s, axis=-1, keepdims=True)
        p = jnp.exp(s)
        p = p * pl.reciprocal(jnp.sum(p, axis=-1, keepdims=True), approx=True)
        ctx = jnp.einsum("bqk,bkd->bqd", p.astype(cdt), vh,
                         preferred_element_type=jnp.float32)        # (Bb,S,dk) f32
        # Fold this head's output projection: (BS,dk) @ (dk,D) accumulated in f32.
        part = jnp.dot(ctx.reshape(BS, d_k).astype(cdt),
                       wo_ref[0, lo:lo + d_k, :],
                       preferred_element_type=jnp.float32)          # (BS, D)
        attn = part if attn is None else attn + part
    attn = attn + bo_ref[0]

    # ---- residual + LayerNorm 1 ----
    x1 = _layer_norm(x + attn, g1_ref[0], b1n_ref[0])

    # ---- feed-forward: fc1 -> ReLU -> fc2 ----
    h1 = jnp.dot(x1.astype(cdt), w1_ref[0],
                 preferred_element_type=jnp.float32) + b1_ref[0]
    h1 = jnp.maximum(h1, 0.0)
    ff = jnp.dot(h1.astype(cdt), w2_ref[0],
                 preferred_element_type=jnp.float32) + b2_ref[0]

    # ---- residual + LayerNorm 2 -> resident activations for the next layer ----
    out = _layer_norm(ff + x1, g2_ref[0], b2n_ref[0])
    o_ref[...] = out.reshape(Bb, S, D).astype(o_ref.dtype)


# ------------------------------- Wrapper ------------------------------------ #
def _pick_vmem_limit(Bb, S, D, H):
    """Shape-aware scoped-VMEM budget, capped below physical VMEM."""
    wbytes = 2 * (3 * D * D + D * D + D * H + H * D)          # bf16 per-layer weights
    act = 4 * Bb * S * D                                      # one resident f32 block
    tmp = 4 * Bb * S * (3 * D + H + 2 * D) + 4 * Bb * S * S   # rough working set
    need = 2 * wbytes + 2 * act + 4 * tmp + (2 << 20)         # 2x-buffered weights + slack
    try:
        info = pltpu.get_tpu_info()
        cap = int(getattr(info, "vmem_capacity_bytes", 0) or 0)
    except Exception:
        cap = 0
    if cap <= 0:
        cap = 64 * 1024 * 1024        # conservative fallback (v7x per-TC VMEM)
    return int(min(max(need, 32 * 1024 * 1024), (cap * 3) // 4))


def transformer_encoder_pallas(x, layer_params, *, nheads, batch_block=None):
    """Full transformer encoder. x: [B, S, D] float32."""
    B, S, D = x.shape
    L = len(layer_params)
    H = layer_params[0]["w1"].shape[1]
    assert D % nheads == 0
    d_k = D // nheads
    scale = 1.0 / math.sqrt(d_k)

    if batch_block is None:
        batch_block = B
    assert B % batch_block == 0
    nb = B // batch_block             # "parallel" axis (megacore / v7x dual TC)

    wdt = jnp.bfloat16                # weight / MXU-operand dtype; accumulation f32

    # Stack per-layer weights with a leading layer axis; fuse Wq/Wk/Wv and fold
    # the 1/sqrt(d_k) attention scale into the Q columns (host-side, free).
    wqkv = jnp.stack([jnp.concatenate([p["wq"] * scale, p["wk"], p["wv"]], axis=1)
                      for p in layer_params]).astype(wdt)                 # (L, D, 3D)
    wo = jnp.stack([p["wo"] for p in layer_params]).astype(wdt)           # (L, D, D)
    bo = jnp.stack([p["bo"] for p in layer_params])                       # (L, 1, D)
    g1 = jnp.stack([p["ln1_g"] for p in layer_params])
    b1n = jnp.stack([p["ln1_b"] for p in layer_params])
    w1 = jnp.stack([p["w1"] for p in layer_params]).astype(wdt)           # (L, D, H)
    b1 = jnp.stack([p["b1"] for p in layer_params])                       # (L, 1, H)
    w2 = jnp.stack([p["w2"] for p in layer_params]).astype(wdt)           # (L, H, D)
    b2 = jnp.stack([p["b2"] for p in layer_params])                       # (L, 1, D)
    g2 = jnp.stack([p["ln2_g"] for p in layer_params])
    b2n = jnp.stack([p["ln2_b"] for p in layer_params])

    kernel = functools.partial(encoder_stack_kernel,
                               nheads=nheads, d_k=d_k, Bb=batch_block,
                               S=S, D=D, H=H)

    def wspec(arr):                   # all stacked params are 3-D (L, r, c)
        return pl.BlockSpec((1,) + arr.shape[1:], lambda b, l: (l, 0, 0))

    in_specs = [
        pl.BlockSpec((batch_block, S, D), lambda b, l: (b, 0, 0)),  # x (per-batch block)
        wspec(wqkv), wspec(wo), wspec(bo),
        wspec(g1), wspec(b1n),
        wspec(w1), wspec(b1),
        wspec(w2), wspec(b2),
        wspec(g2), wspec(b2n),
    ]
    # Constant index along the layer axis -> output block stays resident in VMEM
    # across layers and doubles as the activation carry.
    out_spec = pl.BlockSpec((batch_block, S, D), lambda b, l: (b, 0, 0))

    return pl.pallas_call(
        kernel,
        out_shape=jax.ShapeDtypeStruct((B, S, D), x.dtype),
        grid_spec=pltpu.PrefetchScalarGridSpec(
            num_scalar_prefetch=0,
            grid=(nb, L),                       # (batch blocks, layers)
            in_specs=in_specs,
            out_specs=out_spec,
        ),
        compiler_params=pltpu.CompilerParams(
            # Batch-block axis is independent -> parallel (megacore / v7x 2 TCs);
            # layer axis carries state via the resident output block -> arbitrary.
            dimension_semantics=("parallel", "arbitrary"),
            vmem_limit_bytes=_pick_vmem_limit(batch_block, S, D, H),
        ),
    )(x, wqkv, wo, bo, g1, b1n, w1, b1, w2, b2, g2, b2n)


# --------------------------- Pure-JAX reference ----------------------------- #
def _ref_block(x, p, nheads, rw):
    B, S, D = x.shape
    d_k = D // nheads
    q = x @ rw(p["wq"])
    k = x @ rw(p["wk"])
    v = x @ rw(p["wv"])
    q = q.reshape(B, S, nheads, d_k)
    k = k.reshape(B, S, nheads, d_k)
    v = v.reshape(B, S, nheads, d_k)
    s = jnp.einsum("bqhd,bkhd->bhqk", q, k) / math.sqrt(d_k)
    a = jax.nn.softmax(s, axis=-1)
    o = jnp.einsum("bhqk,bkhd->bqhd", a, v).reshape(B, S, D)
    o = o @ rw(p["wo"]) + p["bo"][0]

    def ln(z, g, b):
        mu = z.mean(-1, keepdims=True)
        var = ((z - mu) ** 2).mean(-1, keepdims=True)
        return (z - mu) / jnp.sqrt(var + 1e-5) * g[0] + b[0]

    x1 = ln(x + o, p["ln1_g"], p["ln1_b"])
    ff = jnp.maximum(x1 @ rw(p["w1"]) + p["b1"][0], 0.0) @ rw(p["w2"]) + p["b2"][0]
    return ln(ff + x1, p["ln2_g"], p["ln2_b"])


# --------------------------------- Main ------------------------------------- #
def init_block_params(key, d_model, mlp_hidden):
    ks = jax.random.split(key, 13)
    std = 0.02
    return {
        "wq": std * jax.random.normal(ks[0], (d_model, d_model), jnp.float32),
        "wk": std * jax.random.normal(ks[1], (d_model, d_model), jnp.float32),
        "wv": std * jax.random.normal(ks[2], (d_model, d_model), jnp.float32),
        "wo": std * jax.random.normal(ks[3], (d_model, d_model), jnp.float32),
        "bo": std * jax.random.normal(ks[4], (1, d_model), jnp.float32),
        "ln1_g": 1.0 + 0.1 * jax.random.normal(ks[5], (1, d_model), jnp.float32),
        "ln1_b": 0.1 * jax.random.normal(ks[6], (1, d_model), jnp.float32),
        "w1": std * jax.random.normal(ks[7], (d_model, mlp_hidden), jnp.float32),
        "b1": std * jax.random.normal(ks[8], (1, mlp_hidden), jnp.float32),
        "w2": std * jax.random.normal(ks[9], (mlp_hidden, d_model), jnp.float32),
        "b2": std * jax.random.normal(ks[10], (1, d_model), jnp.float32),
        "ln2_g": 1.0 + 0.1 * jax.random.normal(ks[11], (1, d_model), jnp.float32),
        "ln2_b": 0.1 * jax.random.normal(ks[12], (1, d_model), jnp.float32),
    }


if __name__ == "__main__":
    B, S, D = 2, 8, 32
    NHEADS = 4
    MLP_HIDDEN = 64
    DEPTH = 2

    root = jax.random.PRNGKey(0)
    x_key, *layer_keys = jax.random.split(root, DEPTH + 1)
    x = jax.random.normal(x_key, (B, S, D), jnp.float32)
    layer_params = [init_block_params(k, D, MLP_HIDDEN) for k in layer_keys]

    # batch_block=1 exercises the parallel batch axis (2 blocks) + the layer carry.
    out = transformer_encoder_pallas(x, layer_params, nheads=NHEADS, batch_block=1)
    out = jax.block_until_ready(out)

    # Reference uses the same bf16-rounded weights (kernel stores weights in bf16),
    # with all math in f32; the kernel additionally rounds matmul operands to bf16.
    rw = lambda w: w.astype(jnp.bfloat16).astype(jnp.float32)
    ref = x
    for p in layer_params:
        ref = _ref_block(ref, p, NHEADS, rw)

    assert out.shape == ref.shape
    assert jnp.allclose(out, ref, atol=2e-2, rtol=2e-2), "mismatch vs reference"

    print("KERNEL_OK")
</pallas_src>

<mosaic_0001>
module attributes {stable_mosaic.version = 11 : i64} {
  func.func @encoder_stack_kernel(%arg0: i32, %arg1: i32, %arg2: memref<1x8x32xf32, #tpu.memory_space<vmem>>, %arg3: memref<1x32x96xbf16, #tpu.memory_space<vmem>>, %arg4: memref<1x32x32xbf16, #tpu.memory_space<vmem>>, %arg5: memref<1x1x32xf32, #tpu.memory_space<vmem>>, %arg6: memref<1x1x32xf32, #tpu.memory_space<vmem>>, %arg7: memref<1x1x32xf32, #tpu.memory_space<vmem>>, %arg8: memref<1x32x64xbf16, #tpu.memory_space<vmem>>, %arg9: memref<1x1x64xf32, #tpu.memory_space<vmem>>, %arg10: memref<1x64x32xbf16, #tpu.memory_space<vmem>>, %arg11: memref<1x1x32xf32, #tpu.memory_space<vmem>>, %arg12: memref<1x1x32xf32, #tpu.memory_space<vmem>>, %arg13: memref<1x1x32xf32, #tpu.memory_space<vmem>>, %arg14: memref<1x8x32xf32, #tpu.memory_space<vmem>>) attributes {dimension_semantics = [#tpu.dimension_semantics<parallel>, #tpu.dimension_semantics<arbitrary>], iteration_bounds = array<i64: 2, 2>, scalar_prefetch = 0 : i64, scratch_operands = 0 : i64, tpu.core_type = #tpu.core_type<tc>, window_params = [{transform_indices = @transform_0, window_bounds = array<i64: 1, 8, 32>}, {transform_indices = @transform_1, window_bounds = array<i64: 1, 32, 96>}, {transform_indices = @transform_2, window_bounds = array<i64: 1, 32, 32>}, {transform_indices = @transform_3, window_bounds = array<i64: 1, 1, 32>}, {transform_indices = @transform_4, window_bounds = array<i64: 1, 1, 32>}, {transform_indices = @transform_5, window_bounds = array<i64: 1, 1, 32>}, {transform_indices = @transform_6, window_bounds = array<i64: 1, 32, 64>}, {transform_indices = @transform_7, window_bounds = array<i64: 1, 1, 64>}, {transform_indices = @transform_8, window_bounds = array<i64: 1, 64, 32>}, {transform_indices = @transform_9, window_bounds = array<i64: 1, 1, 32>}, {transform_indices = @transform_10, window_bounds = array<i64: 1, 1, 32>}, {transform_indices = @transform_11, window_bounds = array<i64: 1, 1, 32>}, {transform_indices = @transform_12, window_bounds = array<i64: 1, 8, 32>}]} {
    %c0_i32 = arith.constant 0 : i32
    %0 = arith.cmpi eq, %arg1, %c0_i32 : i32
    %1 = arith.extui %0 : i1 to i32
    %c0_i32_0 = arith.constant 0 : i32
    %2 = arith.cmpi ne, %1, %c0_i32_0 : i32
    scf.if %2 {
      %c0_78 = arith.constant 0 : index
      %c0_79 = arith.constant 0 : index
      %c0_80 = arith.constant 0 : index
      %187 = vector.load %arg2[%c0_78, %c0_79, %c0_80] : memref<1x8x32xf32, #tpu.memory_space<vmem>>, vector<1x8x32xf32>
      %c0_81 = arith.constant 0 : index
      %c0_82 = arith.constant 0 : index
      %c0_83 = arith.constant 0 : index
      %188 = vector.load %arg14[%c0_81, %c0_82, %c0_83] : memref<1x8x32xf32, #tpu.memory_space<vmem>>, vector<1x8x32xf32>
      tpu.vector_store %arg14[%c0_81, %c0_82, %c0_83], %187 {strides = array<i32>} : memref<1x8x32xf32, #tpu.memory_space<vmem>>, vector<1x8x32xf32>,
    } else {
    }
    %c0 = arith.constant 0 : index
    %c0_1 = arith.constant 0 : index
    %c0_2 = arith.constant 0 : index
    %3 = vector.load %arg14[%c0, %c0_1, %c0_2] : memref<1x8x32xf32, #tpu.memory_space<vmem>>, vector<1x8x32xf32>
    %4 = vector.shape_cast %3 : vector<1x8x32xf32> to vector<8x32xf32>
    %5 = arith.truncf %4 : vector<8x32xf32> to vector<8x32xbf16>
    %c0_3 = arith.constant 0 : index
    %c0_4 = arith.constant 0 : index
    %c0_5 = arith.constant 0 : index
    %6 = vector.load %arg3[%c0_3, %c0_4, %c0_5] : memref<1x32x96xbf16, #tpu.memory_space<vmem>>, vector<1x32x96xbf16>
    %7 = vector.shape_cast %6 : vector<1x32x96xbf16> to vector<32x96xbf16>
    %cst = arith.constant dense<0.000000e+00> : vector<8x96xf32>
    %8 = tpu.matmul %5, %7, %cst {dimension_numbers = #tpu.dot_dimension_numbers<[1], [0], [0], [1], [0, 0, 1, 1], [], []>} : vector<8x32xbf16>, vector<32x96xbf16>, vector<8x96xf32> -> vector<8x96xf32>
    %9 = arith.truncf %8 : vector<8x96xf32> to vector<8x96xbf16>
    %10 = vector.extract_strided_slice %9 {offsets = [0, 0], sizes = [8, 8], strides = [1, 1]} : vector<8x96xbf16> to vector<8x8xbf16>
    %11 = vector.shape_cast %10 : vector<8x8xbf16> to vector<1x8x8xbf16>
    %12 = vector.extract_strided_slice %9 {offsets = [0, 32], sizes = [8, 8], strides = [1, 1]} : vector<8x96xbf16> to vector<8x8xbf16>
    %13 = vector.shape_cast %12 : vector<8x8xbf16> to vector<1x8x8xbf16>
    %14 = vector.extract_strided_slice %9 {offsets = [0, 64], sizes = [8, 8], strides = [1, 1]} : vector<8x96xbf16> to vector<8x8xbf16>
    %15 = vector.shape_cast %14 : vector<8x8xbf16> to vector<1x8x8xbf16>
    "tpu.trace_start"() <{level = 10 : i32, message = "bqd,bkd->bqk"}> : () -> ()
    %cst_6 = arith.constant dense<0.000000e+00> : vector<1x8x8xf32>
    %16 = tpu.matmul %11, %13, %cst_6 {dimension_numbers = #tpu.dot_dimension_numbers<[2], [2], [1], [1], [0, 0, 0, 1, 1, 1], [0], [0]>} : vector<1x8x8xbf16>, vector<1x8x8xbf16>, vector<1x8x8xf32> -> vector<1x8x8xf32>
    "tpu.trace_stop"() : () -> ()
    %cst_7 = arith.constant dense<0xFF800000> : vector<1x8xf32>
    %17 = vector.multi_reduction <maximumf>, %16, %cst_7 [2] : vector<1x8x8xf32> to vector<1x8xf32>
    %18 = vector.shape_cast %17 : vector<1x8xf32> to vector<1x8x1xf32>
    %19 = vector.broadcast %18 : vector<1x8x1xf32> to vector<1x8x8xf32>
    %20 = arith.subf %16, %19 : vector<1x8x8xf32>
    %21 = math.exp %20 : vector<1x8x8xf32>
    %cst_8 = arith.constant dense<0.000000e+00> : vector<1x8xf32>
    %22 = vector.multi_reduction <add>, %21, %cst_8 [2] : vector<1x8x8xf32> to vector<1x8xf32>
    %23 = vector.shape_cast %22 : vector<1x8xf32> to vector<1x8x1xf32>
    %24 = tpu.reciprocal %23 {approx = true} : vector<1x8x1xf32> -> vector<1x8x1xf32>
    %25 = vector.broadcast %24 : vector<1x8x1xf32> to vector<1x8x8xf32>
    %26 = arith.mulf %21, %25 : vector<1x8x8xf32>
    %27 = arith.truncf %26 : vector<1x8x8xf32> to vector<1x8x8xbf16>
    "tpu.trace_start"() <{level = 10 : i32, message = "bqk,bkd->bqd"}> : () -> ()
    %cst_9 = arith.constant dense<0.000000e+00> : vector<1x8x8xf32>
    %28 = tpu.matmul %27, %15, %cst_9 {dimension_numbers = #tpu.dot_dimension_numbers<[2], [1], [1], [2], [0, 0, 0, 1, 1, 2], [0], [0]>} : vector<1x8x8xbf16>, vector<1x8x8xbf16>, vector<1x8x8xf32> -> vector<1x8x8xf32>
    "tpu.trace_stop"() : () -> ()
    %29 = vector.shape_cast %28 : vector<1x8x8xf32> to vector<8x8xf32>
    %30 = arith.truncf %29 : vector<8x8xf32> to vector<8x8xbf16>
    %c0_10 = arith.constant 0 : index
    %c0_11 = arith.constant 0 : index
    %c0_12 = arith.constant 0 : index
    %31 = vector.load %arg4[%c0_10, %c0_11, %c0_12] : memref<1x32x32xbf16, #tpu.memory_space<vmem>>, vector<1x8x32xbf16>
    %32 = vector.shape_cast %31 : vector<1x8x32xbf16> to vector<8x32xbf16>
    %cst_13 = arith.constant dense<0.000000e+00> : vector<8x32xf32>
    %33 = tpu.matmul %30, %32, %cst_13 {dimension_numbers = #tpu.dot_dimension_numbers<[1], [0], [0], [1], [0, 0, 1, 1], [], []>} : vector<8x8xbf16>, vector<8x32xbf16>, vector<8x32xf32> -> vector<8x32xf32>
    %34 = vector.extract_strided_slice %9 {offsets = [0, 8], sizes = [8, 8], strides = [1, 1]} : vector<8x96xbf16> to vector<8x8xbf16>
    %35 = vector.shape_cast %34 : vector<8x8xbf16> to vector<1x8x8xbf16>
    %36 = vector.extract_strided_slice %9 {offsets = [0, 40], sizes = [8, 8], strides = [1, 1]} : vector<8x96xbf16> to vector<8x8xbf16>
    %37 = vector.shape_cast %36 : vector<8x8xbf16> to vector<1x8x8xbf16>
    %38 = vector.extract_strided_slice %9 {offsets = [0, 72], sizes = [8, 8], strides = [1, 1]} : vector<8x96xbf16> to vector<8x8xbf16>
    %39 = vector.shape_cast %38 : vector<8x8xbf16> to vector<1x8x8xbf16>
    "tpu.trace_start"() <{level = 10 : i32, message = "bqd,bkd->bqk"}> : () -> ()
    %cst_14 = arith.constant dense<0.000000e+00> : vector<1x8x8xf32>
    %40 = tpu.matmul %35, %37, %cst_14 {dimension_numbers = #tpu.dot_dimension_numbers<[2], [2], [1], [1], [0, 0, 0, 1, 1, 1], [0], [0]>} : vector<1x8x8xbf16>, vector<1x8x8xbf16>, vector<1x8x8xf32> -> vector<1x8x8xf32>
    "tpu.trace_stop"() : () -> ()
    %cst_15 = arith.constant dense<0xFF800000> : vector<1x8xf32>
    %41 = vector.multi_reduction <maximumf>, %40, %cst_15 [2] : vector<1x8x8xf32> to vector<1x8xf32>
    %42 = vector.shape_cast %41 : vector<1x8xf32> to vector<1x8x1xf32>
    %43 = vector.broadcast %42 : vector<1x8x1xf32> to vector<1x8x8xf32>
    %44 = arith.subf %40, %43 : vector<1x8x8xf32>
    %45 = math.exp %44 : vector<1x8x8xf32>
    %cst_16 = arith.constant dense<0.000000e+00> : vector<1x8xf32>
    %46 = vector.multi_reduction <add>, %45, %cst_16 [2] : vector<1x8x8xf32> to vector<1x8xf32>
    %47 = vector.shape_cast %46 : vector<1x8xf32> to vector<1x8x1xf32>
    %48 = tpu.reciprocal %47 {approx = true} : vector<1x8x1xf32> -> vector<1x8x1xf32>
    %49 = vector.broadcast %48 : vector<1x8x1xf32> to vector<1x8x8xf32>
    %50 = arith.mulf %45, %49 : vector<1x8x8xf32>
    %51 = arith.truncf %50 : vector<1x8x8xf32> to vector<1x8x8xbf16>
    "tpu.trace_start"() <{level = 10 : i32, message = "bqk,bkd->bqd"}> : () -> ()
    %cst_17 = arith.constant dense<0.000000e+00> : vector<1x8x8xf32>
    %52 = tpu.matmul %51, %39, %cst_17 {dimension_numbers = #tpu.dot_dimension_numbers<[2], [1], [1], [2], [0, 0, 0, 1, 1, 2], [0], [0]>} : vector<1x8x8xbf16>, vector<1x8x8xbf16>, vector<1x8x8xf32> -> vector<1x8x8xf32>
    "tpu.trace_stop"() : () -> ()
    %53 = vector.shape_cast %52 : vector<1x8x8xf32> to vector<8x8xf32>
    %54 = arith.truncf %53 : vector<8x8xf32> to vector<8x8xbf16>
    %c0_18 = arith.constant 0 : index
    %c8 = arith.constant 8 : index
    %c0_19 = arith.constant 0 : index
    %55 = vector.load %arg4[%c0_18, %c8, %c0_19] : memref<1x32x32xbf16, #tpu.memory_space<vmem>>, vector<1x8x32xbf16>
    %56 = vector.shape_cast %55 : vector<1x8x32xbf16> to vector<8x32xbf16>
    %cst_20 = arith.constant dense<0.000000e+00> : vector<8x32xf32>
    %57 = tpu.matmul %54, %56, %cst_20 {dimension_numbers = #tpu.dot_dimension_numbers<[1], [0], [0], [1], [0, 0, 1, 1], [], []>} : vector<8x8xbf16>, vector<8x32xbf16>, vector<8x32xf32> -> vector<8x32xf32>
    %58 = arith.addf %33, %57 : vector<8x32xf32>
    %59 = vector.extract_strided_slice %9 {offsets = [0, 16], sizes = [8, 8], strides = [1, 1]} : vector<8x96xbf16> to vector<8x8xbf16>
    %60 = vector.shape_cast %59 : vector<8x8xbf16> to vector<1x8x8xbf16>
    %61 = vector.extract_strided_slice %9 {offsets = [0, 48], sizes = [8, 8], strides = [1, 1]} : vector<8x96xbf16> to vector<8x8xbf16>
    %62 = vector.shape_cast %61 : vector<8x8xbf16> to vector<1x8x8xbf16>
    %63 = vector.extract_strided_slice %9 {offsets = [0, 80], sizes = [8, 8], strides = [1, 1]} : vector<8x96xbf16> to vector<8x8xbf16>
    %64 = vector.shape_cast %63 : vector<8x8xbf16> to vector<1x8x8xbf16>
    "tpu.trace_start"() <{level = 10 : i32, message = "bqd,bkd->bqk"}> : () -> ()
    %cst_21 = arith.constant dense<0.000000e+00> : vector<1x8x8xf32>
    %65 = tpu.matmul %60, %62, %cst_21 {dimension_numbers = #tpu.dot_dimension_numbers<[2], [2], [1], [1], [0, 0, 0, 1, 1, 1], [0], [0]>} : vector<1x8x8xbf16>, vector<1x8x8xbf16>, vector<1x8x8xf32> -> vector<1x8x8xf32>
    "tpu.trace_stop"() : () -> ()
    %cst_22 = arith.constant dense<0xFF800000> : vector<1x8xf32>
    %66 = vector.multi_reduction <maximumf>, %65, %cst_22 [2] : vector<1x8x8xf32> to vector<1x8xf32>
    %67 = vector.shape_cast %66 : vector<1x8xf32> to vector<1x8x1xf32>
    %68 = vector.broadcast %67 : vector<1x8x1xf32> to vector<1x8x8xf32>
    %69 = arith.subf %65, %68 : vector<1x8x8xf32>
    %70 = math.exp %69 : vector<1x8x8xf32>
    %cst_23 = arith.constant dense<0.000000e+00> : vector<1x8xf32>
    %71 = vector.multi_reduction <add>, %70, %cst_23 [2] : vector<1x8x8xf32> to vector<1x8xf32>
    %72 = vector.shape_cast %71 : vector<1x8xf32> to vector<1x8x1xf32>
    %73 = tpu.reciprocal %72 {approx = true} : vector<1x8x1xf32> -> vector<1x8x1xf32>
    %74 = vector.broadcast %73 : vector<1x8x1xf32> to vector<1x8x8xf32>
    %75 = arith.mulf %70, %74 : vector<1x8x8xf32>
    %76 = arith.truncf %75 : vector<1x8x8xf32> to vector<1x8x8xbf16>
    "tpu.trace_start"() <{level = 10 : i32, message = "bqk,bkd->bqd"}> : () -> ()
    %cst_24 = arith.constant dense<0.000000e+00> : vector<1x8x8xf32>
    %77 = tpu.matmul %76, %64, %cst_24 {dimension_numbers = #tpu.dot_dimension_numbers<[2], [1], [1], [2], [0, 0, 0, 1, 1, 2], [0], [0]>} : vector<1x8x8xbf16>, vector<1x8x8xbf16>, vector<1x8x8xf32> -> vector<1x8x8xf32>
    "tpu.trace_stop"() : () -> ()
    %78 = vector.shape_cast %77 : vector<1x8x8xf32> to vector<8x8xf32>
    %79 = arith.truncf %78 : vector<8x8xf32> to vector<8x8xbf16>
    %c0_25 = arith.constant 0 : index
    %c16 = arith.constant 16 : index
    %c0_26 = arith.constant 0 : index
    %80 = vector.load %arg4[%c0_25, %c16, %c0_26] : memref<1x32x32xbf16, #tpu.memory_space<vmem>>, vector<1x8x32xbf16>
    %81 = vector.shape_cast %80 : vector<1x8x32xbf16> to vector<8x32xbf16>
    %cst_27 = arith.constant dense<0.000000e+00> : vector<8x32xf32>
    %82 = tpu.matmul %79, %81, %cst_27 {dimension_numbers = #tpu.dot_dimension_numbers<[1], [0], [0], [1], [0, 0, 1, 1], [], []>} : vector<8x8xbf16>, vector<8x32xbf16>, vector<8x32xf32> -> vector<8x32xf32>
    %83 = arith.addf %58, %82 : vector<8x32xf32>
    %84 = vector.extract_strided_slice %9 {offsets = [0, 24], sizes = [8, 8], strides = [1, 1]} : vector<8x96xbf16> to vector<8x8xbf16>
    %85 = vector.shape_cast %84 : vector<8x8xbf16> to vector<1x8x8xbf16>
    %86 = vector.extract_strided_slice %9 {offsets = [0, 56], sizes = [8, 8], strides = [1, 1]} : vector<8x96xbf16> to vector<8x8xbf16>
    %87 = vector.shape_cast %86 : vector<8x8xbf16> to vector<1x8x8xbf16>
    %88 = vector.extract_strided_slice %9 {offsets = [0, 88], sizes = [8, 8], strides = [1, 1]} : vector<8x96xbf16> to vector<8x8xbf16>
    %89 = vector.shape_cast %88 : vector<8x8xbf16> to vector<1x8x8xbf16>
    "tpu.trace_start"() <{level = 10 : i32, message = "bqd,bkd->bqk"}> : () -> ()
    %cst_28 = arith.constant dense<0.000000e+00> : vector<1x8x8xf32>
    %90 = tpu.matmul %85, %87, %cst_28 {dimension_numbers = #tpu.dot_dimension_numbers<[2], [2], [1], [1], [0, 0, 0, 1, 1, 1], [0], [0]>} : vector<1x8x8xbf16>, vector<1x8x8xbf16>, vector<1x8x8xf32> -> vector<1x8x8xf32>
    "tpu.trace_stop"() : () -> ()
    %cst_29 = arith.constant dense<0xFF800000> : vector<1x8xf32>
    %91 = vector.multi_reduction <maximumf>, %90, %cst_29 [2] : vector<1x8x8xf32> to vector<1x8xf32>
    %92 = vector.shape_cast %91 : vector<1x8xf32> to vector<1x8x1xf32>
    %93 = vector.broadcast %92 : vector<1x8x1xf32> to vector<1x8x8xf32>
    %94 = arith.subf %90, %93 : vector<1x8x8xf32>
    %95 = math.exp %94 : vector<1x8x8xf32>
    %cst_30 = arith.constant dense<0.000000e+00> : vector<1x8xf32>
    %96 = vector.multi_reduction <add>, %95, %cst_30 [2] : vector<1x8x8xf32> to vector<1x8xf32>
    %97 = vector.shape_cast %96 : vector<1x8xf32> to vector<1x8x1xf32>
    %98 = tpu.reciprocal %97 {approx = true} : vector<1x8x1xf32> -> vector<1x8x1xf32>
    %99 = vector.broadcast %98 : vector<1x8x1xf32> to vector<1x8x8xf32>
    %100 = arith.mulf %95, %99 : vector<1x8x8xf32>
    %101 = arith.truncf %100 : vector<1x8x8xf32> to vector<1x8x8xbf16>
    "tpu.trace_start"() <{level = 10 : i32, message = "bqk,bkd->bqd"}> : () -> ()
    %cst_31 = arith.constant dense<0.000000e+00> : vector<1x8x8xf32>
    %102 = tpu.matmul %101, %89, %cst_31 {dimension_numbers = #tpu.dot_dimension_numbers<[2], [1], [1], [2], [0, 0, 0, 1, 1, 2], [0], [0]>} : vector<1x8x8xbf16>, vector<1x8x8xbf16>, vector<1x8x8xf32> -> vector<1x8x8xf32>
    "tpu.trace_stop"() : () -> ()
    %103 = vector.shape_cast %102 : vector<1x8x8xf32> to vector<8x8xf32>
    %104 = arith.truncf %103 : vector<8x8xf32> to vector<8x8xbf16>
    %c0_32 = arith.constant 0 : index
    %c24 = arith.constant 24 : index
    %c0_33 = arith.constant 0 : index
    %105 = vector.load %arg4[%c0_32, %c24, %c0_33] : memref<1x32x32xbf16, #tpu.memory_space<vmem>>, vector<1x8x32xbf16>
    %106 = vector.shape_cast %105 : vector<1x8x32xbf16> to vector<8x32xbf16>
    %cst_34 = arith.constant dense<0.000000e+00> : vector<8x32xf32>
    %107 = tpu.matmul %104, %106, %cst_34 {dimension_numbers = #tpu.dot_dimension_numbers<[1], [0], [0], [1], [0, 0, 1, 1], [], []>} : vector<8x8xbf16>, vector<8x32xbf16>, vector<8x32xf32> -> vector<8x32xf32>
    %108 = arith.addf %83, %107 : vector<8x32xf32>
    %c0_35 = arith.constant 0 : index
    %c0_36 = arith.constant 0 : index
    %c0_37 = arith.constant 0 : index
    %109 = vector.load %arg5[%c0_35, %c0_36, %c0_37] : memref<1x1x32xf32, #tpu.memory_space<vmem>>, vector<1x1x32xf32>
    %110 = vector.shape_cast %109 : vector<1x1x32xf32> to vector<1x32xf32>
    %111 = vector.broadcast %110 : vector<1x32xf32> to vector<8x32xf32>
    %112 = arith.addf %108, %111 : vector<8x32xf32>
    %113 = arith.addf %4, %112 : vector<8x32xf32>
    %c0_38 = arith.constant 0 : index
    %c0_39 = arith.constant 0 : index
    %c0_40 = arith.constant 0 : index
    %114 = vector.load %arg6[%c0_38, %c0_39, %c0_40] : memref<1x1x32xf32, #tpu.memory_space<vmem>>, vector<1x1x32xf32>
    %115 = vector.shape_cast %114 : vector<1x1x32xf32> to vector<1x32xf32>
    %c0_41 = arith.constant 0 : index
    %c0_42 = arith.constant 0 : index
    %c0_43 = arith.constant 0 : index
    %116 = vector.load %arg7[%c0_41, %c0_42, %c0_43] : memref<1x1x32xf32, #tpu.memory_space<vmem>>, vector<1x1x32xf32>
    %117 = vector.shape_cast %116 : vector<1x1x32xf32> to vector<1x32xf32>
    %cst_44 = arith.constant dense<0.000000e+00> : vector<8xf32>
    %118 = vector.multi_reduction <add>, %113, %cst_44 [1] : vector<8x32xf32> to vector<8xf32>
    %119 = vector.shape_cast %118 : vector<8xf32> to vector<8x1xf32>
    %cst_45 = arith.constant 3.125000e-02 : f32
    %120 = vector.broadcast %cst_45 : f32 to vector<8x1xf32>
    %121 = arith.mulf %119, %120 : vector<8x1xf32>
    %122 = arith.mulf %113, %113 : vector<8x32xf32>
    %cst_46 = arith.constant dense<0.000000e+00> : vector<8xf32>
    %123 = vector.multi_reduction <add>, %122, %cst_46 [1] : vector<8x32xf32> to vector<8xf32>
    %124 = vector.shape_cast %123 : vector<8xf32> to vector<8x1xf32>
    %cst_47 = arith.constant 3.125000e-02 : f32
    %125 = vector.broadcast %cst_47 : f32 to vector<8x1xf32>
    %126 = arith.mulf %124, %125 : vector<8x1xf32>
    %127 = arith.mulf %121, %121 : vector<8x1xf32>
    %128 = arith.subf %126, %127 : vector<8x1xf32>
    %129 = vector.broadcast %121 : vector<8x1xf32> to vector<8x32xf32>
    %130 = arith.subf %113, %129 : vector<8x32xf32>
    %cst_48 = arith.constant 9.99999974E-6 : f32
    %131 = vector.broadcast %cst_48 : f32 to vector<8x1xf32>
    %132 = arith.addf %128, %131 : vector<8x1xf32>
    %133 = math.rsqrt %132 : vector<8x1xf32>
    %134 = vector.broadcast %133 : vector<8x1xf32> to vector<8x32xf32>
    %135 = arith.mulf %130, %134 : vector<8x32xf32>
    %136 = vector.broadcast %115 : vector<1x32xf32> to vector<8x32xf32>
    %137 = arith.mulf %135, %136 : vector<8x32xf32>
    %138 = vector.broadcast %117 : vector<1x32xf32> to vector<8x32xf32>
    %139 = arith.addf %137, %138 : vector<8x32xf32>
    %140 = arith.truncf %139 : vector<8x32xf32> to vector<8x32xbf16>
    %c0_49 = arith.constant 0 : index
    %c0_50 = arith.constant 0 : index
    %c0_51 = arith.constant 0 : index
    %141 = vector.load %arg8[%c0_49, %c0_50, %c0_51] : memref<1x32x64xbf16, #tpu.memory_space<vmem>>, vector<1x32x64xbf16>
    %142 = vector.shape_cast %141 : vector<1x32x64xbf16> to vector<32x64xbf16>
    %cst_52 = arith.constant dense<0.000000e+00> : vector<8x64xf32>
    %143 = tpu.matmul %140, %142, %cst_52 {dimension_numbers = #tpu.dot_dimension_numbers<[1], [0], [0], [1], [0, 0, 1, 1], [], []>} : vector<8x32xbf16>, vector<32x64xbf16>, vector<8x64xf32> -> vector<8x64xf32>
    %c0_53 = arith.constant 0 : index
    %c0_54 = arith.constant 0 : index
    %c0_55 = arith.constant 0 : index
    %144 = vector.load %arg9[%c0_53, %c0_54, %c0_55] : memref<1x1x64xf32, #tpu.memory_space<vmem>>, vector<1x1x64xf32>
    %145 = vector.shape_cast %144 : vector<1x1x64xf32> to vector<1x64xf32>
    %146 = vector.broadcast %145 : vector<1x64xf32> to vector<8x64xf32>
    %147 = arith.addf %143, %146 : vector<8x64xf32>
    %cst_56 = arith.constant 0.000000e+00 : f32
    %148 = vector.broadcast %cst_56 : f32 to vector<8x64xf32>
    %149 = arith.maximumf %147, %148 : vector<8x64xf32>
    %150 = arith.truncf %149 : vector<8x64xf32> to vector<8x64xbf16>
    %c0_57 = arith.constant 0 : index
    %c0_58 = arith.constant 0 : index
    %c0_59 = arith.constant 0 : index
    %151 = vector.load %arg10[%c0_57, %c0_58, %c0_59] : memref<1x64x32xbf16, #tpu.memory_space<vmem>>, vector<1x64x32xbf16>
    %152 = vector.shape_cast %151 : vector<1x64x32xbf16> to vector<64x32xbf16>
    %cst_60 = arith.constant dense<0.000000e+00> : vector<8x32xf32>
    %153 = tpu.matmul %150, %152, %cst_60 {dimension_numbers = #tpu.dot_dimension_numbers<[1], [0], [0], [1], [0, 0, 1, 1], [], []>} : vector<8x64xbf16>, vector<64x32xbf16>, vector<8x32xf32> -> vector<8x32xf32>
    %c0_61 = arith.constant 0 : index
    %c0_62 = arith.constant 0 : index
    %c0_63 = arith.constant 0 : index
    %154 = vector.load %arg11[%c0_61, %c0_62, %c0_63] : memref<1x1x32xf32, #tpu.memory_space<vmem>>, vector<1x1x32xf32>
    %155 = vector.shape_cast %154 : vector<1x1x32xf32> to vector<1x32xf32>
    %156 = vector.broadcast %155 : vector<1x32xf32> to vector<8x32xf32>
    %157 = arith.addf %153, %156 : vector<8x32xf32>
    %158 = arith.addf %157, %139 : vector<8x32xf32>
    %c0_64 = arith.constant 0 : index
    %c0_65 = arith.constant 0 : index
    %c0_66 = arith.constant 0 : index
    %159 = vector.load %arg12[%c0_64, %c0_65, %c0_66] : memref<1x1x32xf32, #tpu.memory_space<vmem>>, vector<1x1x32xf32>
    %160 = vector.shape_cast %159 : vector<1x1x32xf32> to vector<1x32xf32>
    %c0_67 = arith.constant 0 : index
    %c0_68 = arith.constant 0 : index
    %c0_69 = arith.constant 0 : index
    %161 = vector.load %arg13[%c0_67, %c0_68, %c0_69] : memref<1x1x32xf32, #tpu.memory_space<vmem>>, vector<1x1x32xf32>
    %162 = vector.shape_cast %161 : vector<1x1x32xf32> to vector<1x32xf32>
    %cst_70 = arith.constant dense<0.000000e+00> : vector<8xf32>
    %163 = vector.multi_reduction <add>, %158, %cst_70 [1] : vector<8x32xf32> to vector<8xf32>
    %164 = vector.shape_cast %163 : vector<8xf32> to vector<8x1xf32>
    %cst_71 = arith.constant 3.125000e-02 : f32
    %165 = vector.broadcast %cst_71 : f32 to vector<8x1xf32>
    %166 = arith.mulf %164, %165 : vector<8x1xf32>
    %167 = arith.mulf %158, %158 : vector<8x32xf32>
    %cst_72 = arith.constant dense<0.000000e+00> : vector<8xf32>
    %168 = vector.multi_reduction <add>, %167, %cst_72 [1] : vector<8x32xf32> to vector<8xf32>
    %169 = vector.shape_cast %168 : vector<8xf32> to vector<8x1xf32>
    %cst_73 = arith.constant 3.125000e-02 : f32
    %170 = vector.broadcast %cst_73 : f32 to vector<8x1xf32>
    %171 = arith.mulf %169, %170 : vector<8x1xf32>
    %172 = arith.mulf %166, %166 : vector<8x1xf32>
    %173 = arith.subf %171, %172 : vector<8x1xf32>
    %174 = vector.broadcast %166 : vector<8x1xf32> to vector<8x32xf32>
    %175 = arith.subf %158, %174 : vector<8x32xf32>
    %cst_74 = arith.constant 9.99999974E-6 : f32
    %176 = vector.broadcast %cst_74 : f32 to vector<8x1xf32>
    %177 = arith.addf %173, %176 : vector<8x1xf32>
    %178 = math.rsqrt %177 : vector<8x1xf32>
    %179 = vector.broadcast %178 : vector<8x1xf32> to vector<8x32xf32>
    %180 = arith.mulf %175, %179 : vector<8x32xf32>
    %181 = vector.broadcast %160 : vector<1x32xf32> to vector<8x32xf32>
    %182 = arith.mulf %180, %181 : vector<8x32xf32>
    %183 = vector.broadcast %162 : vector<1x32xf32> to vector<8x32xf32>
    %184 = arith.addf %182, %183 : vector<8x32xf32>
    %185 = vector.shape_cast %184 : vector<8x32xf32> to vector<1x8x32xf32>
    %c0_75 = arith.constant 0 : index
    %c0_76 = arith.constant 0 : index
    %c0_77 = arith.constant 0 : index
    %186 = vector.load %arg14[%c0_75, %c0_76, %c0_77] : memref<1x8x32xf32, #tpu.memory_space<vmem>>, vector<1x8x32xf32>
    tpu.vector_store %arg14[%c0_75, %c0_76, %c0_77], %185 {strides = array<i32>} : memref<1x8x32xf32, #tpu.memory_space<vmem>>, vector<1x8x32xf32>,
    return
  }
  func.func @transform_0(%arg0: i32, %arg1: i32) -> (i32, i32, i32) {
    %c0_i32 = arith.constant 0 : i32
    %c0_i32_0 = arith.constant 0 : i32
    %c0_i32_1 = arith.constant 0 : i32
    return %arg0, %c0_i32, %c0_i32_0 : i32, i32, i32
  }
  func.func @transform_1(%arg0: i32, %arg1: i32) -> (i32, i32, i32) {
    %c0_i32 = arith.constant 0 : i32
    %c0_i32_0 = arith.constant 0 : i32
    %c0_i32_1 = arith.constant 0 : i32
    return %arg1, %c0_i32, %c0_i32_0 : i32, i32, i32
  }
  func.func @transform_2(%arg0: i32, %arg1: i32) -> (i32, i32, i32) {
    %c0_i32 = arith.constant 0 : i32
    %c0_i32_0 = arith.constant 0 : i32
    %c0_i32_1 = arith.constant 0 : i32
    return %arg1, %c0_i32, %c0_i32_0 : i32, i32, i32
  }
  func.func @transform_3(%arg0: i32, %arg1: i32) -> (i32, i32, i32) {
    %c0_i32 = arith.constant 0 : i32
    %c0_i32_0 = arith.constant 0 : i32
    %c0_i32_1 = arith.constant 0 : i32
    return %arg1, %c0_i32, %c0_i32_0 : i32, i32, i32
  }
  func.func @transform_4(%arg0: i32, %arg1: i32) -> (i32, i32, i32) {
    %c0_i32 = arith.constant 0 : i32
    %c0_i32_0 = arith.constant 0 : i32
    %c0_i32_1 = arith.constant 0 : i32
    return %arg1, %c0_i32, %c0_i32_0 : i32, i32, i32
  }
  func.func @transform_5(%arg0: i32, %arg1: i32) -> (i32, i32, i32) {
    %c0_i32 = arith.constant 0 : i32
    %c0_i32_0 = arith.constant 0 : i32
    %c0_i32_1 = arith.constant 0 : i32
    return %arg1, %c0_i32, %c0_i32_0 : i32, i32, i32
  }
  func.func @transform_6(%arg0: i32, %arg1: i32) -> (i32, i32, i32) {
    %c0_i32 = arith.constant 0 : i32
    %c0_i32_0 = arith.constant 0 : i32
    %c0_i32_1 = arith.constant 0 : i32
    return %arg1, %c0_i32, %c0_i32_0 : i32, i32, i32
  }
  func.func @transform_7(%arg0: i32, %arg1: i32) -> (i32, i32, i32) {
    %c0_i32 = arith.constant 0 : i32
    %c0_i32_0 = arith.constant 0 : i32
    %c0_i32_1 = arith.constant 0 : i32
    return %arg1, %c0_i32, %c0_i32_0 : i32, i32, i32
  }
  func.func @transform_8(%arg0: i32, %arg1: i32) -> (i32, i32, i32) {
    %c0_i32 = arith.constant 0 : i32
    %c0_i32_0 = arith.constant 0 : i32
    %c0_i32_1 = arith.constant 0 : i32
    return %arg1, %c0_i32, %c0_i32_0 : i32, i32, i32
  }
  func.func @transform_9(%arg0: i32, %arg1: i32) -> (i32, i32, i32) {
    %c0_i32 = arith.constant 0 : i32
    %c0_i32_0 = arith.constant 0 : i32
    %c0_i32_1 = arith.constant 0 : i32
    return %arg1, %c0_i32, %c0_i32_0 : i32, i32, i32
  }
  func.func @transform_10(%arg0: i32, %arg1: i32) -> (i32, i32, i32) {
    %c0_i32 = arith.constant 0 : i32
    %c0_i32_0 = arith.constant 0 : i32
    %c0_i32_1 = arith.constant 0 : i32
    return %arg1, %c0_i32, %c0_i32_0 : i32, i32, i32
  }
  func.func @transform_11(%arg0: i32, %arg1: i32) -> (i32, i32, i32) {
    %c0_i32 = arith.constant 0 : i32
    %c0_i32_0 = arith.constant 0 : i32
    %c0_i32_1 = arith.constant 0 : i32
    return %arg1, %c0_i32, %c0_i32_0 : i32, i32, i32
  }
  func.func @transform_12(%arg0: i32, %arg1: i32) -> (i32, i32, i32) {
    %c0_i32 = arith.constant 0 : i32
    %c0_i32_0 = arith.constant 0 : i32
    %c0_i32_1 = arith.constant 0 : i32
    return %arg0, %c0_i32, %c0_i32_0 : i32, i32, i32
  }
}

</mosaic_0001>

<llo_original>
// kernel: tpu_custom_call.1
$region0: #{tpu_custom_call.1}
  #allocation0 [shape = 'u32[]', space=smem, size = 0x4, offset = 0x4, fixed_abs, tag = 'smem constant byte address 0x4 - core index']
  #allocation1 [shape = 'u32[72,128]{1,0:T(1,128)}', space=vmem, size = 0x9000, scoped, tag = 'internal scratch']
  %s0 = inlined_call_operand.hbm [shape: f32[2,8,32], index: 0, kind: input, shape index: {}]
  %s1 = inlined_call_operand.vmem [shape: bf16[2,32,96], index: 1, kind: input, shape index: {}]
  %s2 = inlined_call_operand.vmem [shape: bf16[2,32,32], index: 2, kind: input, shape index: {}]
  %s3 = inlined_call_operand.hbm [shape: f32[2,1,32], index: 3, kind: input, shape index: {}]
  %s4 = inlined_call_operand.vmem [shape: f32[2,1,32], index: 4, kind: input, shape index: {}]
  %s5 = inlined_call_operand.hbm [shape: f32[2,1,32], index: 5, kind: input, shape index: {}]
  %s6 = inlined_call_operand.vmem [shape: bf16[2,32,64], index: 6, kind: input, shape index: {}]
  %s7 = inlined_call_operand.vmem [shape: f32[2,1,64], index: 7, kind: input, shape index: {}]
  %s8 = inlined_call_operand.vmem [shape: bf16[2,64,32], index: 8, kind: input, shape index: {}]
  %s9 = inlined_call_operand.vmem [shape: f32[2,1,32], index: 9, kind: input, shape index: {}]
  %s10 = inlined_call_operand.vmem [shape: f32[2,1,32], index: 10, kind: input, shape index: {}]
  %s11 = inlined_call_operand.hbm [shape: f32[2,1,32], index: 11, kind: input, shape index: {}]
  %s12 = inlined_call_operand.hbm [shape: f32[2,8,32], index: 12, kind: output, shape index: {}]
  %s13 = sld [smem:[#allocation0]]
  $region101: #{tpu_custom_call.1} parent=0
    _
  %s15 = ssub.s32 1, %s13
  %s16 = scalar_select 0, %s15, %s13
  $region1: #{tpu_custom_call.1} parent=0
    #allocation2 [shape = 'u8[8192]{0}', space=vmem, size = 0x2000, scoped, tag = 'input window, operand 0']
    #allocation3 [shape = 's32[2]{0}', space=sflag, size = 0x8, scoped, tag = 'scoped memory for tpu_custom_call.1']
    #allocation4 [shape = 's32[2]{0}', space=sflag, size = 0x8, scoped, tag = 'scoped memory for tpu_custom_call.1']
    #allocation5 [shape = 'u8[1024]{0}', space=vmem, size = 0x400, scoped, tag = 'input window, operand 3']
    #allocation6 [shape = 's32[2]{0}', space=sflag, size = 0x8, scoped, tag = 'scoped memory for tpu_custom_call.1']
    #allocation7 [shape = 'u8[1024]{0}', space=vmem, size = 0x400, scoped, tag = 'input window, operand 5']
    #allocation8 [shape = 'u8[1024]{0}', space=vmem, size = 0x400, scoped, tag = 'input window, operand 11']
    #allocation9 [shape = 's32[2]{0}', space=sflag, size = 0x8, scoped, tag = 'scoped memory for tpu_custom_call.1']
    #allocation10 [shape = 'u8[8192]{0}', space=vmem, size = 0x2000, scoped, tag = 'output window, operand 0']
    %17 = vsyncpa [#allocation3], 0
    %s18 = scalar_lea.sflag [#allocation3], 1
    %19 = vsyncpa %s18, 0
    %20 = vsyncpa [#allocation6], 0
    %s21 = scalar_lea.sflag [#allocation6], 1
    %22 = vsyncpa %s21, 0
    %23 = vsyncpa [#allocation9], 0
    %s24 = scalar_lea.sflag [#allocation9], 1
    %25 = vsyncpa %s24, 0
    %26 = vsyncpa [#allocation4], 0
    %s27 = scalar_lea.sflag [#allocation4], 1
    %28 = vsyncpa %s27, 0
    loop: start=0, step=1, limit=6
    $region2: #{tpu_custom_call.1} parent=1 // loop_pre_header
      _
    $region3: #{tpu_custom_call.1} parent=1 // loop_header
      %s30 = sphi 0, %s34
      %p31 = scmp.ge.s32.totalorder %s30, 6
      %s37 = sphi 0, %s49
      %s38 = sphi 0, %s45
      %s39 = sphi 0, %s37
      %s40 = sphi 0, %s38
      %s41 = sphi 0, %s39
      %s42 = sphi 0, %s40
      %s52 = sphi 0, %s54
      %s55 = sphi 0, %s52
      %s56 = sphi 0, %s55
      %s72 = sphi 0, %s56
      %s78 = sphi 0, %s80
      %s81 = sphi 0, %s78
      %s82 = sphi 0, %s81
      %s98 = sphi 0, %s82
      %s104 = sphi 0, %s106
      %s107 = sphi 0, %s104
      %s108 = sphi 0, %s107
      %s124 = sphi 0, %s108
      %s130 = sphi 0, %s132
      %s133 = sphi 0, %s130
      %s134 = sphi 0, %s133
      %s150 = sphi 0, %s134
      %s156 = sphi 0, %s158
      %s159 = sphi 0, %s156
      %s160 = sphi 0, %s159
      %s176 = sphi 0, %s160
      %s182 = sphi 0, %s184
      %s185 = sphi 0, %s182
      %s186 = sphi 0, %s185
      %s202 = sphi 0, %s186
      %s208 = sphi 0, %s210
      %s211 = sphi 0, %s208
      %s212 = sphi 0, %s211
      %s228 = sphi 0, %s212
      %s234 = sphi 0, %s236
      %s237 = sphi 0, %s234
      %s238 = sphi 0, %s237
      %s254 = sphi 0, %s238
      %s260 = sphi 0, %s262
      %s263 = sphi 0, %s260
      %s264 = sphi 0, %s263
      %s280 = sphi 0, %s264
      %s286 = sphi 0, %s288
      %s289 = sphi 0, %s286
      %s290 = sphi 0, %s289
      %s306 = sphi 0, %s290
      %s312 = sphi 0, %s314
      %s315 = sphi 0, %s312
      %s316 = sphi 0, %s315
      %s332 = sphi 0, %s316
      %s338 = sphi 0, %s340
      %s341 = sphi 0, %s338
      %s342 = sphi 0, %s341
      %s358 = sphi 0, %s342
      %s364 = sphi 0, %s366
      %s367 = sphi 0, %s364
      %s368 = sphi 0, %s367
      %s384 = sphi 0, %s368
    $region4: #{tpu_custom_call.1} parent=1 // loop_header_branch
      %33 = sbr.rel (%p31) target = $region8
    $region5: #{tpu_custom_call.1} parent=1 // loop_body
      %s35 = ssub.s32 %s30, 1
      %s36 = ssub.s32 %s30, 2
      %s43 = sadd.s32 1, %s38
      %p44 = scmp.ge.s32.totalorder %s43, 2
      %s45 = scalar_select %p44, 0, %s43
      %s46 = sadd.s32 1, %s37
      %s47 = scalar_select %p44, %s46, %s37
      %p48 = scmp.ge.s32.totalorder %s47, 2
      %s49 = scalar_select %p48, 0, %s47
      %s50 = ssub.s32 %s37, %s49
      %p51 = scmp.eq.s32.totalorder %s50, 0
      %s53 = sadd.s32 %s52, 1
      %s54 = scalar_select %p51, %s52, %s53
      %p57 = pneg %p51
      %p58 = scmp.eq.s32.totalorder %s30, 3
      %p59 = por %p57, %p58
      %p60 = scmp.ne.s32.totalorder %s52, %s55
      %p61 = scmp.eq.s32.totalorder %s30, 0
      %p62 = por %p60, %p61
      %p63 = scmp.ne.s32.totalorder %s52, %s55
      %p64 = scmp.eq.s32.totalorder %s35, 3
      %p65 = por %p63, %p64
      %p66 = scmp.ne.s32.totalorder %s55, %s56
      %p67 = scmp.eq.s32.totalorder %s35, 0
      %p68 = por %p66, %p67
      %p69 = scmp.ne.s32.totalorder %s55, %s56
      %p70 = scmp.eq.s32.totalorder %s36, 3
      %p71 = por %p69, %p70
      %p73 = scmp.ne.s32.totalorder %s56, %s72
      %p74 = scmp.eq.s32.totalorder %s36, 0
      %p75 = por %p73, %p74
      %s76 = ssub.s32 %s38, %s45
      %p77 = scmp.eq.s32.totalorder %s76, 0
      %s79 = sadd.s32 %s78, 1
      %s80 = scalar_select %p77, %s78, %s79
      %p83 = pneg %p77
      %p84 = scmp.eq.s32.totalorder %s30, 3
      %p85 = por %p83, %p84
      %p86 = scmp.ne.s32.totalorder %s78, %s81
      %p87 = scmp.eq.s32.totalorder %s30, 0
      %p88 = por %p86, %p87
      %p89 = scmp.ne.s32.totalorder %s78, %s81
      %p90 = scmp.eq.s32.totalorder %s35, 3
      %p91 = por %p89, %p90
      %p92 = scmp.ne.s32.totalorder %s81, %s82
      %p93 = scmp.eq.s32.totalorder %s35, 0
      %p94 = por %p92, %p93
      %p95 = scmp.ne.s32.totalorder %s81, %s82
      %p96 = scmp.eq.s32.totalorder %s36, 3
      %p97 = por %p95, %p96
      %p99 = scmp.ne.s32.totalorder %s82, %s98
      %p100 = scmp.eq.s32.totalorder %s36, 0
      %p101 = por %p99, %p100
      %s102 = ssub.s32 %s38, %s45
      %p103 = scmp.eq.s32.totalorder %s102, 0
      %s105 = sadd.s32 %s104, 1
      %s106 = scalar_select %p103, %s104, %s105
      %p109 = pneg %p103
      %p110 = scmp.eq.s32.totalorder %s30, 3
      %p111 = por %p109, %p110
      %p112 = scmp.ne.s32.totalorder %s104, %s107
      %p113 = scmp.eq.s32.totalorder %s30, 0
      %p114 = por %p112, %p113
      %p115 = scmp.ne.s32.totalorder %s104, %s107
      %p116 = scmp.eq.s32.totalorder %s35, 3
      %p117 = por %p115, %p116
      %p118 = scmp.ne.s32.totalorder %s107, %s108
      %p119 = scmp.eq.s32.totalorder %s35, 0
      %p120 = por %p118, %p119
      %p121 = scmp.ne.s32.totalorder %s107, %s108
      %p122 = scmp.eq.s32.totalorder %s36, 3
      %p123 = por %p121, %p122
      %p125 = scmp.ne.s32.totalorder %s108, %s124
      %p126 = scmp.eq.s32.totalorder %s36, 0
      %p127 = por %p125, %p126
      %s128 = ssub.s32 %s38, %s45
      %p129 = scmp.eq.s32.totalorder %s128, 0
      %s131 = sadd.s32 %s130, 1
      %s132 = scalar_select %p129, %s130, %s131
      %p135 = pneg %p129
      %p136 = scmp.eq.s32.totalorder %s30, 3
      %p137 = por %p135, %p136
      %p138 = scmp.ne.s32.totalorder %s130, %s133
      %p139 = scmp.eq.s32.totalorder %s30, 0
      %p140 = por %p138, %p139
      %p141 = scmp.ne.s32.totalorder %s130, %s133
      %p142 = scmp.eq.s32.totalorder %s35, 3
      %p143 = por %p141, %p142
      %p144 = scmp.ne.s32.totalorder %s133, %s134
      %p145 = scmp.eq.s32.totalorder %s35, 0
      %p146 = por %p144, %p145
      %p147 = scmp.ne.s32.totalorder %s133, %s134
      %p148 = scmp.eq.s32.totalorder %s36, 3
      %p149 = por %p147, %p148
      %p151 = scmp.ne.s32.totalorder %s134, %s150
      %p152 = scmp.eq.s32.totalorder %s36, 0
      %p153 = por %p151, %p152
      %s154 = ssub.s32 %s38, %s45
      %p155 = scmp.eq.s32.totalorder %s154, 0
      %s157 = sadd.s32 %s156, 1
      %s158 = scalar_select %p155, %s156, %s157
      %p161 = pneg %p155
      %p162 = scmp.eq.s32.totalorder %s30, 3
      %p163 = por %p161, %p162
      %p164 = scmp.ne.s32.totalorder %s156, %s159
      %p165 = scmp.eq.s32.totalorder %s30, 0
      %p166 = por %p164, %p165
      %p167 = scmp.ne.s32.totalorder %s156, %s159
      %p168 = scmp.eq.s32.totalorder %s35, 3
      %p169 = por %p167, %p168
      %p170 = scmp.ne.s32.totalorder %s159, %s160
      %p171 = scmp.eq.s32.totalorder %s35, 0
      %p172 = por %p170, %p171
      %p173 = scmp.ne.s32.totalorder %s159, %s160
      %p174 = scmp.eq.s32.totalorder %s36, 3
      %p175 = por %p173, %p174
      %p177 = scmp.ne.s32.totalorder %s160, %s176
      %p178 = scmp.eq.s32.totalorder %s36, 0
      %p179 = por %p177, %p178
      %s180 = ssub.s32 %s38, %s45
      %p181 = scmp.eq.s32.totalorder %s180, 0
      %s183 = sadd.s32 %s182, 1
      %s184 = scalar_select %p181, %s182, %s183
      %p187 = pneg %p181
      %p188 = scmp.eq.s32.totalorder %s30, 3
      %p189 = por %p187, %p188
      %p190 = scmp.ne.s32.totalorder %s182, %s185
      %p191 = scmp.eq.s32.totalorder %s30, 0
      %p192 = por %p190, %p191
      %p193 = scmp.ne.s32.totalorder %s182, %s185
      %p194 = scmp.eq.s32.totalorder %s35, 3
      %p195 = por %p193, %p194
      %p196 = scmp.ne.s32.totalorder %s185, %s186
      %p197 = scmp.eq.s32.totalorder %s35, 0
      %p198 = por %p196, %p197
      %p199 = scmp.ne.s32.totalorder %s185, %s186
      %p200 = scmp.eq.s32.totalorder %s36, 3
      %p201 = por %p199, %p200
      %p203 = scmp.ne.s32.totalorder %s186, %s202
      %p204 = scmp.eq.s32.totalorder %s36, 0
      %p205 = por %p203, %p204
      %s206 = ssub.s32 %s38, %s45
      %p207 = scmp.eq.s32.totalorder %s206, 0
      %s209 = sadd.s32 %s208, 1
      %s210 = scalar_select %p207, %s208, %s209
      %p213 = pneg %p207
      %p214 = scmp.eq.s32.totalorder %s30, 3
      %p215 = por %p213, %p214
      %p216 = scmp.ne.s32.totalorder %s208, %s211
      %p217 = scmp.eq.s32.totalorder %s30, 0
      %p218 = por %p216, %p217
      %p219 = scmp.ne.s32.totalorder %s208, %s211
      %p220 = scmp.eq.s32.totalorder %s35, 3
      %p221 = por %p219, %p220
      %p222 = scmp.ne.s32.totalorder %s211, %s212
      %p223 = scmp.eq.s32.totalorder %s35, 0
      %p224 = por %p222, %p223
      %p225 = scmp.ne.s32.totalorder %s211, %s212
      %p226 = scmp.eq.s32.totalorder %s36, 3
      %p227 = por %p225, %p226
      %p229 = scmp.ne.s32.totalorder %s212, %s228
      %p230 = scmp.eq.s32.totalorder %s36, 0
      %p231 = por %p229, %p230
      %s232 = ssub.s32 %s38, %s45
      %p233 = scmp.eq.s32.totalorder %s232, 0
      %s235 = sadd.s32 %s234, 1
      %s236 = scalar_select %p233, %s234, %s235
      %p239 = pneg %p233
      %p240 = scmp.eq.s32.totalorder %s30, 3
      %p241 = por %p239, %p240
      %p242 = scmp.ne.s32.totalorder %s234, %s237
      %p243 = scmp.eq.s32.totalorder %s30, 0
      %p244 = por %p242, %p243
      %p245 = scmp.ne.s32.totalorder %s234, %s237
      %p246 = scmp.eq.s32.totalorder %s35, 3
      %p247 = por %p245, %p246
      %p248 = scmp.ne.s32.totalorder %s237, %s238
      %p249 = scmp.eq.s32.totalorder %s35, 0
      %p250 = por %p248, %p249
      %p251 = scmp.ne.s32.totalorder %s237, %s238
      %p252 = scmp.eq.s32.totalorder %s36, 3
      %p253 = por %p251, %p252
      %p255 = scmp.ne.s32.totalorder %s238, %s254
      %p256 = scmp.eq.s32.totalorder %s36, 0
      %p257 = por %p255, %p256
      %s258 = ssub.s32 %s38, %s45
      %p259 = scmp.eq.s32.totalorder %s258, 0
      %s261 = sadd.s32 %s260, 1
      %s262 = scalar_select %p259, %s260, %s261
      %p265 = pneg %p259
      %p266 = scmp.eq.s32.totalorder %s30, 3
      %p267 = por %p265, %p266
      %p268 = scmp.ne.s32.totalorder %s260, %s263
      %p269 = scmp.eq.s32.totalorder %s30, 0
      %p270 = por %p268, %p269
      %p271 = scmp.ne.s32.totalorder %s260, %s263
      %p272 = scmp.eq.s32.totalorder %s35, 3
      %p273 = por %p271, %p272
      %p274 = scmp.ne.s32.totalorder %s263, %s264
      %p275 = scmp.eq.s32.totalorder %s35, 0
      %p276 = por %p274, %p275
      %p277 = scmp.ne.s32.totalorder %s263, %s264
      %p278 = scmp.eq.s32.totalorder %s36, 3
      %p279 = por %p277, %p278
      %p281 = scmp.ne.s32.totalorder %s264, %s280
      %p282 = scmp.eq.s32.totalorder %s36, 0
      %p283 = por %p281, %p282
      %s284 = ssub.s32 %s38, %s45
      %p285 = scmp.eq.s32.totalorder %s284, 0
      %s287 = sadd.s32 %s286, 1
      %s288 = scalar_select %p285, %s286, %s287
      %p291 = pneg %p285
      %p292 = scmp.eq.s32.totalorder %s30, 3
      %p293 = por %p291, %p292
      %p294 = scmp.ne.s32.totalorder %s286, %s289
      %p295 = scmp.eq.s32.totalorder %s30, 0
      %p296 = por %p294, %p295
      %p297 = scmp.ne.s32.totalorder %s286, %s289
      %p298 = scmp.eq.s32.totalorder %s35, 3
      %p299 = por %p297, %p298
      %p300 = scmp.ne.s32.totalorder %s289, %s290
      %p301 = scmp.eq.s32.totalorder %s35, 0
      %p302 = por %p300, %p301
      %p303 = scmp.ne.s32.totalorder %s289, %s290
      %p304 = scmp.eq.s32.totalorder %s36, 3
      %p305 = por %p303, %p304
      %p307 = scmp.ne.s32.totalorder %s290, %s306
      %p308 = scmp.eq.s32.totalorder %s36, 0
      %p309 = por %p307, %p308
      %s310 = ssub.s32 %s38, %s45
      %p311 = scmp.eq.s32.totalorder %s310, 0
      %s313 = sadd.s32 %s312, 1
      %s314 = scalar_select %p311, %s312, %s313
      %p317 = pneg %p311
      %p318 = scmp.eq.s32.totalorder %s30, 3
      %p319 = por %p317, %p318
      %p320 = scmp.ne.s32.totalorder %s312, %s315
      %p321 = scmp.eq.s32.totalorder %s30, 0
      %p322 = por %p320, %p321
      %p323 = scmp.ne.s32.totalorder %s312, %s315
      %p324 = scmp.eq.s32.totalorder %s35, 3
      %p325 = por %p323, %p324
      %p326 = scmp.ne.s32.totalorder %s315, %s316
      %p327 = scmp.eq.s32.totalorder %s35, 0
      %p328 = por %p326, %p327
      %p329 = scmp.ne.s32.totalorder %s315, %s316
      %p330 = scmp.eq.s32.totalorder %s36, 3
      %p331 = por %p329, %p330
      %p333 = scmp.ne.s32.totalorder %s316, %s332
      %p334 = scmp.eq.s32.totalorder %s36, 0
      %p335 = por %p333, %p334
      %s336 = ssub.s32 %s38, %s45
      %p337 = scmp.eq.s32.totalorder %s336, 0
      %s339 = sadd.s32 %s338, 1
      %s340 = scalar_select %p337, %s338, %s339
      %p343 = pneg %p337
      %p344 = scmp.eq.s32.totalorder %s30, 3
      %p345 = por %p343, %p344
      %p346 = scmp.ne.s32.totalorder %s338, %s341
      %p347 = scmp.eq.s32.totalorder %s30, 0
      %p348 = por %p346, %p347
      %p349 = scmp.ne.s32.totalorder %s338, %s341
      %p350 = scmp.eq.s32.totalorder %s35, 3
      %p351 = por %p349, %p350
      %p352 = scmp.ne.s32.totalorder %s341, %s342
      %p353 = scmp.eq.s32.totalorder %s35, 0
      %p354 = por %p352, %p353
      %p355 = scmp.ne.s32.totalorder %s341, %s342
      %p356 = scmp.eq.s32.totalorder %s36, 3
      %p357 = por %p355, %p356
      %p359 = scmp.ne.s32.totalorder %s342, %s358
      %p360 = scmp.eq.s32.totalorder %s36, 0
      %p361 = por %p359, %p360
      %s362 = ssub.s32 %s37, %s49
      %p363 = scmp.eq.s32.totalorder %s362, 0
      %s365 = sadd.s32 %s364, 1
      %s366 = scalar_select %p363, %s364, %s365
      %p369 = pneg %p363
      %p370 = scmp.eq.s32.totalorder %s30, 3
      %p371 = por %p369, %p370
      %p372 = scmp.ne.s32.totalorder %s364, %s367
      %p373 = scmp.eq.s32.totalorder %s30, 0
      %p374 = por %p372, %p373
      %p375 = scmp.ne.s32.totalorder %s364, %s367
      %p376 = scmp.eq.s32.totalorder %s35, 3
      %p377 = por %p375, %p376
      %p378 = scmp.ne.s32.totalorder %s367, %s368
      %p379 = scmp.eq.s32.totalorder %s35, 0
      %p380 = por %p378, %p379
      %p381 = scmp.ne.s32.totalorder %s367, %s368
      %p382 = scmp.eq.s32.totalorder %s36, 3
      %p383 = por %p381, %p382
      %p385 = scmp.ne.s32.totalorder %s368, %s384
      %p386 = scmp.eq.s32.totalorder %s36, 0
      %p387 = por %p385, %p386
      %p388 = scmp.le.s32.totalorder 1, %s30
      %p389 = scmp.lt.s32.totalorder %s30, 5
      %p390 = pnand %p388, %p389
      %p391 = pneg %p390
      // Predicated region
      $region9: #{tpu_custom_call.1} parent=5 // pred_check
        _
      $region10: #{tpu_custom_call.1} parent=5 // pred_check_branch
        %393 = sbr.rel (%p390) target = $region12
      $region11: #{tpu_custom_call.1} parent=5 // pred_region
        %s394 = ssub.s32 %s30, 1
      $region12: #{tpu_custom_call.1} parent=5 // pred_fallthru
        _
      %p395 = scmp.lt.s32.totalorder %s30, 4
      // Predicated region
      $region13: #{tpu_custom_call.1} parent=5 // pred_check
        %p396 = pneg %p395
      $region14: #{tpu_custom_call.1} parent=5 // pred_check_branch
        %398 = sbr.rel (%p396) target = $region16
      $region15: #{tpu_custom_call.1} parent=5 // pred_region
        // Predicated region
        $region17: #{tpu_custom_call.1} parent=15 // pred_check
          %p399 = pneg %p62
        $region18: #{tpu_custom_call.1} parent=15 // pred_check_branch
          %401 = sbr.rel (%p399) target = $region20
        $region19: #{tpu_custom_call.1} parent=15 // pred_region
          %s402 = sand.u32 %s52, 1
          %s403 = scalar_lea.sflag [#allocation3], %s402
          %s404 = sand.u32 %s52, 1
          %s405 = smul.addr %s404, 8
          %s406 = scalar_lea.vmem [#allocation2], %s405
          %408 = vsyncadd %s403, 0
          %s409 = smul.addr %s37, 8
          %s410 = scalar_lea.hbm %s0, %s409
          %s412 = sshll.u32 %s410, 4
          %s413 = int_to_ptr.hbm [resolvable:$true] %s412
          %s414 = sshll.u32 %s406, 4
          %s415 = int_to_ptr.vmem [resolvable:$true] %s414
          %417 = dma.hbm_to_vmem [thread:$0]  %s413, 128, %s415, %s403
        $region20: #{tpu_custom_call.1} parent=15 // pred_fallthru
          _
        // Predicated region
        $region21: #{tpu_custom_call.1} parent=15 // pred_check
          %p418 = pneg %p88
        $region22: #{tpu_custom_call.1} parent=15 // pred_check_branch
          %420 = sbr.rel (%p418) target = $region24
        $region23: #{tpu_custom_call.1} parent=15 // pred_region
          %p421 = scmp.lt.s32.totalorder %s38, 1
          %s422 = scalar_select %p421, %s38, 1
          %s423 = smul.addr %s422, 4
          %s424 = smul.addr %s423, 4
          %s425 = scalar_lea.vmem %s1, %s424
        $region24: #{tpu_custom_call.1} parent=15 // pred_fallthru
          _
        // Predicated region
        $region25: #{tpu_custom_call.1} parent=15 // pred_check
          %p426 = pneg %p114
        $region26: #{tpu_custom_call.1} parent=15 // pred_check_branch
          %428 = sbr.rel (%p426) target = $region28
        $region27: #{tpu_custom_call.1} parent=15 // pred_region
          %p429 = scmp.lt.s32.totalorder %s38, 1
          %s430 = scalar_select %p429, %s38, 1
          %s431 = smul.addr %s430, 4
          %s432 = smul.addr %s431, 4
          %s433 = scalar_lea.vmem %s2, %s432
        $region28: #{tpu_custom_call.1} parent=15 // pred_fallthru
          _
        // Predicated region
        $region29: #{tpu_custom_call.1} parent=15 // pred_check
          %p434 = pneg %p140
        $region30: #{tpu_custom_call.1} parent=15 // pred_check_branch
          %436 = sbr.rel (%p434) target = $region32
        $region31: #{tpu_custom_call.1} parent=15 // pred_region
          %s437 = sand.u32 %s30, 1
          %s438 = scalar_lea.sflag [#allocation6], %s437
          %s439 = sand.u32 %s130, 1
          %s440 = scalar_lea.vmem [#allocation5], %s439
          %442 = vsyncadd %s438, 0
          %s443 = scalar_lea.hbm %s3, %s38
          %s445 = sshll.u32 %s443, 4
          %s446 = int_to_ptr.hbm [resolvable:$true] %s445
          %s447 = sshll.u32 %s440, 4
          %s448 = int_to_ptr.vmem [resolvable:$true] %s447
          %450 = dma.hbm_to_vmem [thread:$0]  %s446, 16, %s448, %s438
        $region32: #{tpu_custom_call.1} parent=15 // pred_fallthru
          _
        // Predicated region
        $region33: #{tpu_custom_call.1} parent=15 // pred_check
          %p451 = pneg %p166
        $region34: #{tpu_custom_call.1} parent=15 // pred_check_branch
          %453 = sbr.rel (%p451) target = $region36
        $region35: #{tpu_custom_call.1} parent=15 // pred_region
          %p454 = scmp.lt.s32.totalorder %s38, 1
          %s455 = scalar_select %p454, %s38, 1
          %s456 = scalar_lea.vmem %s4, %s455
        $region36: #{tpu_custom_call.1} parent=15 // pred_fallthru
          _
        // Predicated region
        $region37: #{tpu_custom_call.1} parent=15 // pred_check
          %p457 = pneg %p192
        $region38: #{tpu_custom_call.1} parent=15 // pred_check_branch
          %459 = sbr.rel (%p457) target = $region40
        $region39: #{tpu_custom_call.1} parent=15 // pred_region
          %s460 = sand.u32 %s30, 1
          %s461 = scalar_lea.sflag [#allocation6], %s460
          %s462 = sand.u32 %s182, 1
          %s463 = scalar_lea.vmem [#allocation7], %s462
          %465 = vsyncadd %s461, 0
          %s466 = scalar_lea.hbm %s5, %s38
          %s468 = sshll.u32 %s466, 4
          %s469 = int_to_ptr.hbm [resolvable:$true] %s468
          %s470 = sshll.u32 %s463, 4
          %s471 = int_to_ptr.vmem [resolvable:$true] %s470
          %473 = dma.hbm_to_vmem [thread:$0]  %s469, 16, %s471, %s461
        $region40: #{tpu_custom_call.1} parent=15 // pred_fallthru
          _
        // Predicated region
        $region41: #{tpu_custom_call.1} parent=15 // pred_check
          %p474 = pneg %p218
        $region42: #{tpu_custom_call.1} parent=15 // pred_check_branch
          %476 = sbr.rel (%p474) target = $region44
        $region43: #{tpu_custom_call.1} parent=15 // pred_region
          %p477 = scmp.lt.s32.totalorder %s38, 1
          %s478 = scalar_select %p477, %s38, 1
          %s479 = smul.addr %s478, 4
          %s480 = smul.addr %s479, 4
          %s481 = scalar_lea.vmem %s6, %s480
        $region44: #{tpu_custom_call.1} parent=15 // pred_fallthru
          _
        // Predicated region
        $region45: #{tpu_custom_call.1} parent=15 // pred_check
          %p482 = pneg %p244
        $region46: #{tpu_custom_call.1} parent=15 // pred_check_branch
          %484 = sbr.rel (%p482) target = $region48
        $region47: #{tpu_custom_call.1} parent=15 // pred_region
          %p485 = scmp.lt.s32.totalorder %s38, 1
          %s486 = scalar_select %p485, %s38, 1
          %s487 = scalar_lea.vmem %s7, %s486
        $region48: #{tpu_custom_call.1} parent=15 // pred_fallthru
          _
        // Predicated region
        $region49: #{tpu_custom_call.1} parent=15 // pred_check
          %p488 = pneg %p270
        $region50: #{tpu_custom_call.1} parent=15 // pred_check_branch
          %490 = sbr.rel (%p488) target = $region52
        $region51: #{tpu_custom_call.1} parent=15 // pred_region
          %p491 = scmp.lt.s32.totalorder %s38, 1
          %s492 = scalar_select %p491, %s38, 1
          %s493 = smul.addr %s492, 8
          %s494 = smul.addr %s493, 4
          %s495 = scalar_lea.vmem %s8, %s494
        $region52: #{tpu_custom_call.1} parent=15 // pred_fallthru
          _
        // Predicated region
        $region53: #{tpu_custom_call.1} parent=15 // pred_check
          %p496 = pneg %p296
        $region54: #{tpu_custom_call.1} parent=15 // pred_check_branch
          %498 = sbr.rel (%p496) target = $region56
        $region55: #{tpu_custom_call.1} parent=15 // pred_region
          %p499 = scmp.lt.s32.totalorder %s38, 1
          %s500 = scalar_select %p499, %s38, 1
          %s501 = scalar_lea.vmem %s9, %s500
        $region56: #{tpu_custom_call.1} parent=15 // pred_fallthru
          _
        // Predicated region
        $region57: #{tpu_custom_call.1} parent=15 // pred_check
          %p502 = pneg %p322
        $region58: #{tpu_custom_call.1} parent=15 // pred_check_branch
          %504 = sbr.rel (%p502) target = $region60
        $region59: #{tpu_custom_call.1} parent=15 // pred_region
          %p505 = scmp.lt.s32.totalorder %s38, 1
          %s506 = scalar_select %p505, %s38, 1
          %s507 = scalar_lea.vmem %s10, %s506
        $region60: #{tpu_custom_call.1} parent=15 // pred_fallthru
          _
        // Predicated region
        $region61: #{tpu_custom_call.1} parent=15 // pred_check
          %p508 = pneg %p348
        $region62: #{tpu_custom_call.1} parent=15 // pred_check_branch
          %510 = sbr.rel (%p508) target = $region64
        $region63: #{tpu_custom_call.1} parent=15 // pred_region
          %s511 = sand.u32 %s338, 1
          %s512 = scalar_lea.sflag [#allocation9], %s511
          %s513 = sand.u32 %s338, 1
          %s514 = scalar_lea.vmem [#allocation8], %s513
          %516 = vsyncadd %s512, 0
          %s517 = scalar_lea.hbm %s11, %s38
          %s519 = sshll.u32 %s517, 4
          %s520 = int_to_ptr.hbm [resolvable:$true] %s519
          %s521 = sshll.u32 %s514, 4
          %s522 = int_to_ptr.vmem [resolvable:$true] %s521
          %524 = dma.hbm_to_vmem [thread:$0]  %s520, 16, %s522, %s512
        $region64: #{tpu_custom_call.1} parent=15 // pred_fallthru
          _
      $region16: #{tpu_custom_call.1} parent=5 // pred_fallthru
        _
      %p525 = scmp.le.s32.totalorder 1, %s30
      %p526 = scmp.lt.s32.totalorder %s30, 5
      %p527 = pnand %p525, %p526
      %p528 = pneg %p527
      // Predicated region
      $region65: #{tpu_custom_call.1} parent=5 // pred_check
        _
      $region66: #{tpu_custom_call.1} parent=5 // pred_check_branch
        %530 = sbr.rel (%p527) target = $region68
      $region67: #{tpu_custom_call.1} parent=5 // pred_region
        %s531 = ssub.s32 %s30, 1
        %s532 = sand.u32 %s55, 1
        %s533 = scalar_lea.sflag [#allocation3], %s532
        %s534 = sand.u32 %s55, 1
        %s535 = smul.addr %s534, 8
        %s536 = scalar_lea.vmem [#allocation2], %s535
        // Predicated region
        $region69: #{tpu_custom_call.1} parent=67 // pred_check
          %p537 = pneg %p68
        $region70: #{tpu_custom_call.1} parent=67 // pred_check_branch
          %539 = sbr.rel (%p537) target = $region72
        $region71: #{tpu_custom_call.1} parent=67 // pred_region
          %541 = dma.done %s533, 128
        $region72: #{tpu_custom_call.1} parent=67 // pred_fallthru
          _
        %s542 = sand.u32 %s35, 1
        %s543 = scalar_lea.sflag [#allocation6], %s542
        %s544 = sand.u32 %s133, 1
        %s545 = scalar_lea.vmem [#allocation5], %s544
        // Predicated region
        $region73: #{tpu_custom_call.1} parent=67 // pred_check
          %p546 = pneg %p146
        $region74: #{tpu_custom_call.1} parent=67 // pred_check_branch
          %548 = sbr.rel (%p546) target = $region76
        $region75: #{tpu_custom_call.1} parent=67 // pred_region
          %550 = dma.done %s543, 16
        $region76: #{tpu_custom_call.1} parent=67 // pred_fallthru
          _
        %s551 = sand.u32 %s35, 1
        %s552 = scalar_lea.sflag [#allocation6], %s551
        %s553 = sand.u32 %s185, 1
        %s554 = scalar_lea.vmem [#allocation7], %s553
        // Predicated region
        $region77: #{tpu_custom_call.1} parent=67 // pred_check
          %p555 = pneg %p198
        $region78: #{tpu_custom_call.1} parent=67 // pred_check_branch
          %557 = sbr.rel (%p555) target = $region80
        $region79: #{tpu_custom_call.1} parent=67 // pred_region
          %559 = dma.done %s552, 16
        $region80: #{tpu_custom_call.1} parent=67 // pred_fallthru
          _
        %s560 = sand.u32 %s341, 1
        %s561 = scalar_lea.sflag [#allocation9], %s560
        %s562 = sand.u32 %s341, 1
        %s563 = scalar_lea.vmem [#allocation8], %s562
        // Predicated region
        $region81: #{tpu_custom_call.1} parent=67 // pred_check
          %p564 = pneg %p354
        $region82: #{tpu_custom_call.1} parent=67 // pred_check_branch
          %566 = sbr.rel (%p564) target = $region84
        $region83: #{tpu_custom_call.1} parent=67 // pred_region
          %568 = dma.done %s561, 16
        $region84: #{tpu_custom_call.1} parent=67 // pred_fallthru
          _
        %s569 = sand.u32 %s55, 1
        %s570 = scalar_lea.sflag [#allocation3], %s569
        %s571 = sand.u32 %s55, 1
        %s572 = smul.addr %s571, 8
        %s573 = scalar_lea.vmem [#allocation2], %s572
        %p574 = pneg %p68
        %p575 = pneg %p65
        %p576 = scmp.lt.s32.totalorder %s40, 1
        %s577 = scalar_select %p576, %s40, 1
        %s578 = smul.addr %s577, 4
        %s579 = smul.addr %s578, 4
        %s580 = scalar_lea.vmem %s1, %s579
        %p581 = pneg %p94
        %p582 = pneg %p91
        %p583 = scmp.lt.s32.totalorder %s40, 1
        %s584 = scalar_select %p583, %s40, 1
        %s585 = smul.addr %s584, 4
        %s586 = smul.addr %s585, 4
        %s587 = scalar_lea.vmem %s2, %s586
        %p588 = pneg %p120
        %p589 = pneg %p117
        %s590 = sand.u32 %s35, 1
        %s591 = scalar_lea.sflag [#allocation6], %s590
        %s592 = sand.u32 %s133, 1
        %s593 = scalar_lea.vmem [#allocation5], %s592
        %p594 = pneg %p146
        %p595 = pneg %p143
        %p596 = scmp.lt.s32.totalorder %s40, 1
        %s597 = scalar_select %p596, %s40, 1
        %s598 = scalar_lea.vmem %s4, %s597
        %p599 = pneg %p172
        %p600 = pneg %p169
        %s601 = sand.u32 %s35, 1
        %s602 = scalar_lea.sflag [#allocation6], %s601
        %s603 = sand.u32 %s185, 1
        %s604 = scalar_lea.vmem [#allocation7], %s603
        %p605 = pneg %p198
        %p606 = pneg %p195
        %p607 = scmp.lt.s32.totalorder %s40, 1
        %s608 = scalar_select %p607, %s40, 1
        %s609 = smul.addr %s608, 4
        %s610 = smul.addr %s609, 4
        %s611 = scalar_lea.vmem %s6, %s610
        %p612 = pneg %p224
        %p613 = pneg %p221
        %p614 = scmp.lt.s32.totalorder %s40, 1
        %s615 = scalar_select %p614, %s40, 1
        %s616 = scalar_lea.vmem %s7, %s615
        %p617 = pneg %p250
        %p618 = pneg %p247
        %p619 = scmp.lt.s32.totalorder %s40, 1
        %s620 = scalar_select %p619, %s40, 1
        %s621 = smul.addr %s620, 8
        %s622 = smul.addr %s621, 4
        %s623 = scalar_lea.vmem %s8, %s622
        %p624 = pneg %p276
        %p625 = pneg %p273
        %p626 = scmp.lt.s32.totalorder %s40, 1
        %s627 = scalar_select %p626, %s40, 1
        %s628 = scalar_lea.vmem %s9, %s627
        %p629 = pneg %p302
        %p630 = pneg %p299
        %p631 = scmp.lt.s32.totalorder %s40, 1
        %s632 = scalar_select %p631, %s40, 1
        %s633 = scalar_lea.vmem %s10, %s632
        %p634 = pneg %p328
        %p635 = pneg %p325
        %s636 = sand.u32 %s341, 1
        %s637 = scalar_lea.sflag [#allocation9], %s636
        %s638 = sand.u32 %s341, 1
        %s639 = scalar_lea.vmem [#allocation8], %s638
        %p640 = pneg %p354
        %p641 = pneg %p351
        %p642 = pneg %p380
        %p643 = pneg %p377
        %s644 = sand.u32 %s367, 1
        %s645 = scalar_lea.sflag [#allocation4], %s644
        %s646 = sand.u32 %s367, 1
        %s647 = smul.addr %s646, 8
        %s648 = scalar_lea.vmem [#allocation10], %s647
        %p649 = scmp.lt.s32.totalorder %s40, 1
        %s650 = scalar_select %p649, %s40, 1
        %s651 = smul.addr %s650, 4
        %s652 = smul.addr %s651, 4
        %s653 = scalar_lea.vmem %s1, %s652
        %p654 = scmp.lt.s32.totalorder %s40, 1
        %s655 = scalar_select %p654, %s40, 1
        %s656 = smul.addr %s655, 4
        %s657 = smul.addr %s656, 4
        %s658 = scalar_lea.vmem %s2, %s657
        %p659 = scmp.lt.s32.totalorder %s40, 1
        %s660 = scalar_select %p659, %s40, 1
        %s661 = scalar_lea.vmem %s4, %s660
        %p662 = scmp.lt.s32.totalorder %s40, 1
        %s663 = scalar_select %p662, %s40, 1
        %s664 = smul.addr %s663, 4
        %s665 = smul.addr %s664, 4
        %s666 = scalar_lea.vmem %s6, %s665
        %p667 = scmp.lt.s32.totalorder %s40, 1
        %s668 = scalar_select %p667, %s40, 1
        %s669 = scalar_lea.vmem %s7, %s668
        %p670 = scmp.lt.s32.totalorder %s40, 1
        %s671 = scalar_select %p670, %s40, 1
        %s672 = smul.addr %s671, 8
        %s673 = smul.addr %s672, 4
        %s674 = scalar_lea.vmem %s8, %s673
        %p675 = scmp.lt.s32.totalorder %s40, 1
        %s676 = scalar_select %p675, %s40, 1
        %s677 = scalar_lea.vmem %s9, %s676
        %p678 = scmp.lt.s32.totalorder %s40, 1
        %s679 = scalar_select %p678, %s40, 1
        %s680 = scalar_lea.vmem %s10, %s679
        %p682 = scmp.eq.s32.totalorder %s40, 0
        // Predicated region
        $region85: #{tpu_custom_call.1} parent=67 // pred_check
          %p683 = pneg %p682
        $region86: #{tpu_custom_call.1} parent=67 // pred_check_branch
          %685 = sbr.rel (%p683) target = $region88
        $region87: #{tpu_custom_call.1} parent=67 // pred_region
          %v686 = vld [vmem:[%s536] sm:$0xff]
          %vm687 = vcmask 261120
          %688 = vst.msk [vmem:[%s648] sm:$0xff] %vm687, %v686
        $region88: #{tpu_custom_call.1} parent=67 // pred_fallthru
          _
        %v689 = vld [vmem:[%s648] sm:$0xff]
        %v690 = vpack.c.bf16 %v689, %v689
        %v691 = vld [vmem:[%s653] sm:$0xf]
        %v692 = vld [vmem:[%s653 + $0x4] sm:$0xf]
        %v693 = vld [vmem:[%s653 + $0x8] sm:$0xf]
        %v694 = vld [vmem:[%s653 + $0xc] sm:$0xf]
        %v699 = vunpack.c.l.b16 %v691
        %v700 = vunpack.c.l.b16 %v692
        %v701 = vunpack.c.l.b16 %v693
        %v702 = vunpack.c.l.b16 %v694
        %v703 = vpack.c.b16 %v700, %v699
        %v704 = vpack.c.b16 %v702, %v701
        %vm707 = vcmask 261120
        %v709 = vsel %vm707, %v690, 0
        %711 = vmatpush.bf16.msra.mxu0 0
        %712 = vmatpush.bf16.msra.mxu0 0
        %713 = vmatpush.bf16.msra.mxu0 0
        %714 = vmatpush.bf16.msra.mxu0 0
        %715 = vmatpush.bf16.msra.mxu0 0
        %716 = vmatpush.bf16.msra.mxu0 0
        %717 = vmatpush.bf16.msra.mxu0 %v704
        %718 = vmatpush.bf16.msra.mxu0 %v703
        %719 = vmatmul.bf16.gmra.mxu0 %v709
        %v720 = vpop.f32.mrf.mxu0
        %v721 = vadd.f32 0.0, %v720
        %v722 = vpop.f32.mrf.mxu0
        %723 = vdwg.mxu0
        %v724 = vpack.c.bf16 %v721, %v721
        %v726 = vunpack.c.l.b16 %v724
        %v727 = vpack.c.b16 %v726, %v726
        %728 = vrot.lane.b32.xlu0 %v727, 96
        %v729 = vpop.permute.xlu0 %728
        %vm730 = vcmask 64512
        %v732 = vsel %vm730, %v724, 0
        %v735 = vsel %vm730, %v729, 0
        %737 = vmatpush.bf16.xpose.msra.mxu0 0
        %738 = vmatpush.bf16.xpose.msra.mxu0 0
        %739 = vmatpush.bf16.xpose.msra.mxu0 0
        %740 = vmatpush.bf16.xpose.msra.mxu0 0
        %741 = vmatpush.bf16.xpose.msra.mxu0 0
        %742 = vmatpush.bf16.xpose.msra.mxu0 0
        %743 = vmatpush.bf16.xpose.msra.mxu0 0
        %744 = vmatpush.bf16.xpose.msra.mxu0 %v735
        %745 = vmatmul.bf16.gmra.mxu0 %v732
        %v746 = vpop.f32.mrf.mxu0
        %v747 = vadd.f32 0.0, %v746
        %v748 = vpop.f32.mrf.mxu0
        %749 = vdwg.mxu0
        %v750 = vsel %vm730, %v747, -inf
        %751 = vmax.xlane.f32.xlu0 %v750
        %v752 = vpop.xlane.xlu0 %751
        %v753 = vsub.f32 %v747, %v752
        %v754 = vmul.f32 %v753, 1.442695
        %v755 = vpow.pop %v754
        %v756 = vsel %vm730, %v755, 0.0
        %757 = vadd.xlane.f32.xlu0 %v756
        %v758 = vpop.xlane.xlu0 %757
        %v759 = vrcp.pop %v758
        %v760 = vmul.f32 %v755, %v759
        %v761 = vpack.c.bf16 %v760, %v760
        %762 = vrot.lane.b32.xlu0 %v727, 64
        %v763 = vpop.permute.xlu0 %762
        %v765 = vsel %vm730, %v761, 0
        %vm767 = vcmask 1043456
        %v769 = vsel %vm767, %v763, 0
        %771 = vmatpush.bf16.msra.mxu0 0
        %772 = vmatpush.bf16.msra.mxu0 0
        %773 = vmatpush.bf16.msra.mxu0 0
        %774 = vmatpush.bf16.msra.mxu0 0
        %775 = vmatpush.bf16.msra.mxu0 0
        %776 = vmatpush.bf16.msra.mxu0 0
        %777 = vmatpush.bf16.msra.mxu0 0
        %778 = vmatpush.bf16.msra.mxu0 %v769
        %779 = vmatmul.bf16.gmra.mxu0 %v765
        %v780 = vpop.f32.mrf.mxu0
        %v781 = vadd.f32 0.0, %v780
        %v782 = vpop.f32.mrf.mxu0
        %783 = vdwg.mxu0
        %v784 = vpack.c.bf16 %v781, %v781
        %v785 = vld [vmem:[%s658] sm:$0xf]
        %786 = vrot.lane.b32.xlu0 %v727, 120
        %v787 = vpop.permute.xlu0 %786
        %788 = vrot.lane.b32.xlu0 %v727, 88
        %v789 = vpop.permute.xlu0 %788
        %v791 = vsel %vm730, %v787, 0
        %v794 = vsel %vm730, %v789, 0
        %796 = vmatpush.bf16.xpose.msra.mxu0 0
        %797 = vmatpush.bf16.xpose.msra.mxu0 0
        %798 = vmatpush.bf16.xpose.msra.mxu0 0
        %799 = vmatpush.bf16.xpose.msra.mxu0 0
        %800 = vmatpush.bf16.xpose.msra.mxu0 0
        %801 = vmatpush.bf16.xpose.msra.mxu0 0
        %802 = vmatpush.bf16.xpose.msra.mxu0 0
        %803 = vmatpush.bf16.xpose.msra.mxu0 %v794
        %804 = vmatmul.bf16.gmra.mxu0 %v791
        %v805 = vpop.f32.mrf.mxu0
        %v806 = vadd.f32 0.0, %v805
        %v807 = vpop.f32.mrf.mxu0
        %808 = vdwg.mxu0
        %v809 = vsel %vm730, %v806, -inf
        %810 = vmax.xlane.f32.xlu0 %v809
        %v811 = vpop.xlane.xlu0 %810
        %v812 = vsub.f32 %v806, %v811
        %v813 = vmul.f32 %v812, 1.442695
        %v814 = vpow.pop %v813
        %v815 = vsel %vm730, %v814, 0.0
        %816 = vadd.xlane.f32.xlu0 %v815
        %v817 = vpop.xlane.xlu0 %816
        %v818 = vrcp.pop %v817
        %v819 = vmul.f32 %v814, %v818
        %v820 = vpack.c.bf16 %v819, %v819
        %821 = vrot.lane.b32.xlu0 %v727, 56
        %v822 = vpop.permute.xlu0 %821
        %v824 = vsel %vm730, %v820, 0
        %v827 = vsel %vm767, %v822, 0
        %829 = vmatpush.bf16.msra.mxu0 0
        %830 = vmatpush.bf16.msra.mxu0 0
        %831 = vmatpush.bf16.msra.mxu0 0
        %832 = vmatpush.bf16.msra.mxu0 0
        %833 = vmatpush.bf16.msra.mxu0 0
        %834 = vmatpush.bf16.msra.mxu0 0
        %835 = vmatpush.bf16.msra.mxu0 0
        %836 = vmatpush.bf16.msra.mxu0 %v827
        %837 = vmatmul.bf16.gmra.mxu0 %v824
        %v838 = vpop.f32.mrf.mxu0
        %v839 = vadd.f32 0.0, %v838
        %v840 = vpop.f32.mrf.mxu0
        %841 = vdwg.mxu0
        %v842 = vpack.c.bf16 %v839, %v839
        %v843 = vld [vmem:[%s658 + $0x4] sm:$0xf]
        %v845 = vsel %vm730, %v842, 0
        %v848 = vsel %vm767, %v843, 0
        %850 = vmatpush.bf16.msra.mxu0 0
        %851 = vmatpush.bf16.msra.mxu0 0
        %852 = vmatpush.bf16.msra.mxu0 0
        %853 = vmatpush.bf16.msra.mxu0 0
        %854 = vmatpush.bf16.msra.mxu0 0
        %855 = vmatpush.bf16.msra.mxu0 0
        %856 = vmatpush.bf16.msra.mxu0 0
        %857 = vmatpush.bf16.msra.mxu0 %v848
        %858 = vmatmul.bf16.gmra.mxu0 %v845
        %v859 = vpop.f32.mrf.mxu0
        %v860 = vadd.f32 0.0, %v859
        %v861 = vpop.f32.mrf.mxu0
        %862 = vdwg.mxu0
        %v864 = vsel %vm730, %v784, 0
        %v867 = vsel %vm767, %v785, 0
        %869 = vmatpush.bf16.msra.mxu0 0
        %870 = vmatpush.bf16.msra.mxu0 0
        %871 = vmatpush.bf16.msra.mxu0 0
        %872 = vmatpush.bf16.msra.mxu0 0
        %873 = vmatpush.bf16.msra.mxu0 0
        %874 = vmatpush.bf16.msra.mxu0 0
        %875 = vmatpush.bf16.msra.mxu0 0
        %876 = vmatpush.bf16.msra.mxu0 %v867
        %877 = vmatmul.bf16.gmra.mxu0 %v864
        %v878 = vpop.f32.mrf.mxu0
        %v879 = vadd.f32 %v860, %v878
        %v880 = vpop.f32.mrf.mxu0
        %881 = vdwg.mxu0
        %882 = vrot.lane.b32.xlu0 %v727, 112
        %v883 = vpop.permute.xlu0 %882
        %884 = vrot.lane.b32.xlu0 %v727, 80
        %v885 = vpop.permute.xlu0 %884
        %v887 = vsel %vm730, %v883, 0
        %v890 = vsel %vm730, %v885, 0
        %892 = vmatpush.bf16.xpose.msra.mxu0 0
        %893 = vmatpush.bf16.xpose.msra.mxu0 0
        %894 = vmatpush.bf16.xpose.msra.mxu0 0
        %895 = vmatpush.bf16.xpose.msra.mxu0 0
        %896 = vmatpush.bf16.xpose.msra.mxu0 0
        %897 = vmatpush.bf16.xpose.msra.mxu0 0
        %898 = vmatpush.bf16.xpose.msra.mxu0 0
        %899 = vmatpush.bf16.xpose.msra.mxu0 %v890
        %900 = vmatmul.bf16.gmra.mxu0 %v887
        %v901 = vpop.f32.mrf.mxu0
        %v902 = vadd.f32 0.0, %v901
        %v903 = vpop.f32.mrf.mxu0
        %904 = vdwg.mxu0
        %v905 = vsel %vm730, %v902, -inf
        %906 = vmax.xlane.f32.xlu0 %v905
        %v907 = vpop.xlane.xlu0 %906
        %v908 = vsub.f32 %v902, %v907
        %v909 = vmul.f32 %v908, 1.442695
        %v910 = vpow.pop %v909
        %v911 = vsel %vm730, %v910, 0.0
        %912 = vadd.xlane.f32.xlu0 %v911
        %v913 = vpop.xlane.xlu0 %912
        %v914 = vrcp.pop %v913
        %v915 = vmul.f32 %v910, %v914
        %v916 = vpack.c.bf16 %v915, %v915
        %917 = vrot.lane.b32.xlu0 %v727, 48
        %v918 = vpop.permute.xlu0 %917
        %v920 = vsel %vm730, %v916, 0
        %v923 = vsel %vm767, %v918, 0
        %925 = vmatpush.bf16.msra.mxu0 0
        %926 = vmatpush.bf16.msra.mxu0 0
        %927 = vmatpush.bf16.msra.mxu0 0
        %928 = vmatpush.bf16.msra.mxu0 0
        %929 = vmatpush.bf16.msra.mxu0 0
        %930 = vmatpush.bf16.msra.mxu0 0
        %931 = vmatpush.bf16.msra.mxu0 0
        %932 = vmatpush.bf16.msra.mxu0 %v923
        %933 = vmatmul.bf16.gmra.mxu0 %v920
        %v934 = vpop.f32.mrf.mxu0
        %v935 = vadd.f32 0.0, %v934
        %v936 = vpop.f32.mrf.mxu0
        %937 = vdwg.mxu0
        %v938 = vpack.c.bf16 %v935, %v935
        %v939 = vld [vmem:[%s658 + $0x8] sm:$0xf]
        %v941 = vsel %vm730, %v938, 0
        %v944 = vsel %vm767, %v939, 0
        %946 = vmatpush.bf16.msra.mxu0 0
        %947 = vmatpush.bf16.msra.mxu0 0
        %948 = vmatpush.bf16.msra.mxu0 0
        %949 = vmatpush.bf16.msra.mxu0 0
        %950 = vmatpush.bf16.msra.mxu0 0
        %951 = vmatpush.bf16.msra.mxu0 0
        %952 = vmatpush.bf16.msra.mxu0 0
        %953 = vmatpush.bf16.msra.mxu0 %v944
        %954 = vmatmul.bf16.gmra.mxu0 %v941
        %v955 = vpop.f32.mrf.mxu0
        %v956 = vadd.f32 0.0, %v955
        %v957 = vpop.f32.mrf.mxu0
        %958 = vdwg.mxu0
        %v959 = vadd.f32 %v879, %v956
        %960 = vrot.lane.b32.xlu0 %v727, 104
        %v961 = vpop.permute.xlu0 %960
        %962 = vrot.lane.b32.xlu0 %v727, 72
        %v963 = vpop.permute.xlu0 %962
        %v965 = vsel %vm730, %v961, 0
        %v968 = vsel %vm730, %v963, 0
        %970 = vmatpush.bf16.xpose.msra.mxu0 0
        %971 = vmatpush.bf16.xpose.msra.mxu0 0
        %972 = vmatpush.bf16.xpose.msra.mxu0 0
        %973 = vmatpush.bf16.xpose.msra.mxu0 0
        %974 = vmatpush.bf16.xpose.msra.mxu0 0
        %975 = vmatpush.bf16.xpose.msra.mxu0 0
        %976 = vmatpush.bf16.xpose.msra.mxu0 0
        %977 = vmatpush.bf16.xpose.msra.mxu0 %v968
        %978 = vmatmul.bf16.gmra.mxu0 %v965
        %v979 = vpop.f32.mrf.mxu0
        %v980 = vadd.f32 0.0, %v979
        %v981 = vpop.f32.mrf.mxu0
        %982 = vdwg.mxu0
        %v983 = vsel %vm730, %v980, -inf
        %984 = vmax.xlane.f32.xlu0 %v983
        %v985 = vpop.xlane.xlu0 %984
        %v986 = vsub.f32 %v980, %v985
        %v987 = vmul.f32 %v986, 1.442695
        %v988 = vpow.pop %v987
        %v989 = vsel %vm730, %v988, 0.0
        %990 = vadd.xlane.f32.xlu0 %v989
        %v991 = vpop.xlane.xlu0 %990
        %v992 = vrcp.pop %v991
        %v993 = vmul.f32 %v988, %v992
        %v994 = vpack.c.bf16 %v993, %v993
        %995 = vrot.lane.b32.xlu0 %v727, 40
        %v996 = vpop.permute.xlu0 %995
        %v998 = vsel %vm730, %v994, 0
        %v1001 = vsel %vm767, %v996, 0
        %1003 = vmatpush.bf16.msra.mxu0 0
        %1004 = vmatpush.bf16.msra.mxu0 0
        %1005 = vmatpush.bf16.msra.mxu0 0
        %1006 = vmatpush.bf16.msra.mxu0 0
        %1007 = vmatpush.bf16.msra.mxu0 0
        %1008 = vmatpush.bf16.msra.mxu0 0
        %1009 = vmatpush.bf16.msra.mxu0 0
        %1010 = vmatpush.bf16.msra.mxu0 %v1001
        %1011 = vmatmul.bf16.gmra.mxu0 %v998
        %v1012 = vpop.f32.mrf.mxu0
        %v1013 = vadd.f32 0.0, %v1012
        %v1014 = vpop.f32.mrf.mxu0
        %1015 = vdwg.mxu0
        %v1016 = vpack.c.bf16 %v1013, %v1013
        %v1017 = vld [vmem:[%s658 + $0xc] sm:$0xf]
        %v1019 = vsel %vm730, %v1016, 0
        %v1022 = vsel %vm767, %v1017, 0
        %1024 = vmatpush.bf16.msra.mxu0 0
        %1025 = vmatpush.bf16.msra.mxu0 0
        %1026 = vmatpush.bf16.msra.mxu0 0
        %1027 = vmatpush.bf16.msra.mxu0 0
        %1028 = vmatpush.bf16.msra.mxu0 0
        %1029 = vmatpush.bf16.msra.mxu0 0
        %1030 = vmatpush.bf16.msra.mxu0 0
        %1031 = vmatpush.bf16.msra.mxu0 %v1022
        %1032 = vmatmul.bf16.gmra.mxu0 %v1019
        %v1033 = vpop.f32.mrf.mxu0
        %v1034 = vadd.f32 0.0, %v1033
        %v1035 = vpop.f32.mrf.mxu0
        %1036 = vdwg.mxu0
        %v1037 = vadd.f32 %v959, %v1034
        %v1038 = vld [vmem:[%s545] sm:$0x1]
        %v1040 = vperm.slane %v1038, 0
        %v1042 = vadd.f32 %v1037, %v1040
        %v1043 = vadd.f32 %v689, %v1042
        %v1044 = vld [vmem:[%s661] sm:$0x1]
        %v1045 = vld [vmem:[%s554] sm:$0x1]
        %v1046 = vsel %vm707, %v1043, 0.0
        %1047 = vadd.xlane.f32.xlu0 %v1046
        %v1048 = vpop.xlane.xlu0 %1047
        %v1049 = vmul.f32 %v1048, 0.03125
        %v1050 = vmul.f32 %v1043, %v1043
        %v1051 = vsel %vm707, %v1050, 0.0
        %1052 = vadd.xlane.f32.xlu0 %v1051
        %v1053 = vpop.xlane.xlu0 %1052
        %v1054 = vmul.f32 %v1053, 0.03125
        %v1055 = vmul.f32 %v1049, %v1049
        %v1056 = vsub.f32 %v1054, %v1055
        %v1057 = vsub.f32 %v1043, %v1049
        %v1058 = vadd.f32 %v1056, 1e-05
        %v1059 = vrsqrt.pop %v1058
        %v1060 = vmul.f32 %v1059, %v1058
        %v1061 = vmul.f32 %v1060, %v1059
        %v1062 = vmul.f32 0.5, %v1061
        %v1063 = vsub.f32 1.5, %v1062
        %v1064 = vmul.f32 %v1059, %v1063
        %vm1065 = vweird.f32 %v1058
        %vm1066 = vweird.f32 %v1059
        %vm1067 = vmor %vm1065, %vm1066
        %v1068 = vsel %vm1067, %v1059, %v1064
        %v1069 = vmul.f32 %v1057, %v1068
        %v1071 = vperm.slane %v1044, 0
        %v1073 = vmul.f32 %v1069, %v1071
        %v1075 = vperm.slane %v1045, 0
        %v1077 = vadd.f32 %v1073, %v1075
        %v1078 = vpack.c.bf16 %v1077, %v1077
        %v1079 = vld [vmem:[%s666] sm:$0xf]
        %v1080 = vld [vmem:[%s666 + $0x4] sm:$0xf]
        %v1081 = vld [vmem:[%s666 + $0x8] sm:$0xf]
        %v1082 = vld [vmem:[%s666 + $0xc] sm:$0xf]
        %v1083 = vld [vmem:[%s669] sm:$0x1]
        %v1085 = vperm.slane %v1083, 0
        %v1091 = vunpack.c.l.b16 %v1079
        %v1092 = vunpack.c.l.b16 %v1080
        %v1093 = vunpack.c.l.b16 %v1081
        %v1094 = vunpack.c.l.b16 %v1082
        %v1095 = vpack.c.b16 %v1092, %v1091
        %v1096 = vpack.c.b16 %v1094, %v1093
        %v1100 = vsel %vm707, %v1078, 0
        %1102 = vmatpush.bf16.msra.mxu0 0
        %1103 = vmatpush.bf16.msra.mxu0 0
        %1104 = vmatpush.bf16.msra.mxu0 0
        %1105 = vmatpush.bf16.msra.mxu0 0
        %1106 = vmatpush.bf16.msra.mxu0 0
        %1107 = vmatpush.bf16.msra.mxu0 0
        %1108 = vmatpush.bf16.msra.mxu0 %v1096
        %1109 = vmatpush.bf16.msra.mxu0 %v1095
        %1110 = vmatmul.bf16.gmra.mxu0 %v1100
        %v1111 = vpop.f32.mrf.mxu0
        %v1112 = vadd.f32 %v1085, %v1111
        %v1113 = vpop.f32.mrf.mxu0
        %1114 = vdwg.mxu0
        %v1115 = vmax.f32 %v1112, 0.0
        %v1116 = vpack.c.bf16 %v1115, %v1115
        %v1117 = vld [vmem:[%s674] sm:$0xf]
        %v1118 = vld [vmem:[%s674 + $0x4] sm:$0xf]
        %v1119 = vld [vmem:[%s674 + $0x8] sm:$0xf]
        %v1120 = vld [vmem:[%s674 + $0xc] sm:$0xf]
        %v1121 = vld [vmem:[%s674 + $0x10] sm:$0xf]
        %v1122 = vld [vmem:[%s674 + $0x14] sm:$0xf]
        %v1123 = vld [vmem:[%s674 + $0x18] sm:$0xf]
        %v1124 = vld [vmem:[%s674 + $0x1c] sm:$0xf]
        %v1125 = vld [vmem:[%s677] sm:$0x1]
        %v1127 = vperm.slane %v1125, 0
        %v1137 = vunpack.c.l.b16 %v1117
        %v1138 = vunpack.c.l.b16 %v1118
        %v1139 = vunpack.c.l.b16 %v1119
        %v1140 = vunpack.c.l.b16 %v1120
        %v1141 = vunpack.c.l.b16 %v1121
        %v1142 = vunpack.c.l.b16 %v1122
        %v1143 = vunpack.c.l.b16 %v1123
        %v1144 = vunpack.c.l.b16 %v1124
        %v1145 = vpack.c.b16 %v1138, %v1137
        %v1146 = vpack.c.b16 %v1140, %v1139
        %v1147 = vpack.c.b16 %v1142, %v1141
        %v1148 = vpack.c.b16 %v1144, %v1143
        %vm1153 = vcmask 523264
        %v1155 = vsel %vm1153, %v1116, 0
        %1157 = vmatpush.bf16.msra.mxu0 0
        %1158 = vmatpush.bf16.msra.mxu0 0
        %1159 = vmatpush.bf16.msra.mxu0 0
        %1160 = vmatpush.bf16.msra.mxu0 0
        %1161 = vmatpush.bf16.msra.mxu0 %v1148
        %1162 = vmatpush.bf16.msra.mxu0 %v1147
        %1163 = vmatpush.bf16.msra.mxu0 %v1146
        %1164 = vmatpush.bf16.msra.mxu0 %v1145
        %1165 = vmatmul.bf16.gmra.mxu0 %v1155
        %v1166 = vpop.f32.mrf.mxu0
        %v1167 = vadd.f32 %v1127, %v1166
        %v1168 = vpop.f32.mrf.mxu0
        %1169 = vdwg.mxu0
        %v1170 = vadd.f32 %v1167, %v1077
        %v1171 = vld [vmem:[%s680] sm:$0x1]
        %v1172 = vld [vmem:[%s563] sm:$0x1]
        %v1173 = vsel %vm707, %v1170, 0.0
        %1174 = vadd.xlane.f32.xlu0 %v1173
        %v1175 = vpop.xlane.xlu0 %1174
        %v1176 = vmul.f32 %v1175, 0.03125
        %v1177 = vmul.f32 %v1170, %v1170
        %v1178 = vsel %vm707, %v1177, 0.0
        %1179 = vadd.xlane.f32.xlu0 %v1178
        %v1180 = vpop.xlane.xlu0 %1179
        %v1181 = vmul.f32 %v1180, 0.03125
        %v1182 = vmul.f32 %v1176, %v1176
        %v1183 = vsub.f32 %v1181, %v1182
        %v1184 = vsub.f32 %v1170, %v1176
        %v1185 = vadd.f32 %v1183, 1e-05
        %v1186 = vrsqrt.pop %v1185
        %v1187 = vmul.f32 %v1186, %v1185
        %v1188 = vmul.f32 %v1187, %v1186
        %v1189 = vmul.f32 0.5, %v1188
        %v1190 = vsub.f32 1.5, %v1189
        %v1191 = vmul.f32 %v1186, %v1190
        %vm1192 = vweird.f32 %v1185
        %vm1193 = vweird.f32 %v1186
        %vm1194 = vmor %vm1192, %vm1193
        %v1195 = vsel %vm1194, %v1186, %v1191
        %v1196 = vmul.f32 %v1184, %v1195
        %v1198 = vperm.slane %v1171, 0
        %v1200 = vmul.f32 %v1196, %v1198
        %v1202 = vperm.slane %v1172, 0
        %v1204 = vadd.f32 %v1200, %v1202
        %1205 = vst.msk [vmem:[%s648] sm:$0xff] %vm707, %v1204
        %s1206 = sand.u32 %s367, 1
        %s1207 = scalar_lea.sflag [#allocation4], %s1206
        %s1208 = sand.u32 %s367, 1
        %s1209 = smul.addr %s1208, 8
        %s1210 = scalar_lea.vmem [#allocation10], %s1209
        // Predicated region
        $region89: #{tpu_custom_call.1} parent=67 // pred_check
          %p1211 = pneg %p377
        $region90: #{tpu_custom_call.1} parent=67 // pred_check_branch
          %1213 = sbr.rel (%p1211) target = $region92
        $region91: #{tpu_custom_call.1} parent=67 // pred_region
          %1215 = vsyncadd %s1207, 0
          %s1216 = smul.addr %s39, 8
          %s1217 = scalar_lea.hbm %s12, %s1216
          %s1219 = sshll.u32 %s1210, 4
          %s1220 = int_to_ptr.vmem [resolvable:$true] %s1219
          %s1221 = sshll.u32 %s1217, 4
          %s1222 = int_to_ptr.hbm [resolvable:$true] %s1221
          %1224 = dma.vmem_to_hbm [thread:$0]  %s1220, 128, %s1222, %s1207
        $region92: #{tpu_custom_call.1} parent=67 // pred_fallthru
          _
      $region68: #{tpu_custom_call.1} parent=5 // pred_fallthru
        _
      %p1225 = scmp.le.s32.totalorder 2, %s30
      // Predicated region
      $region93: #{tpu_custom_call.1} parent=5 // pred_check
        %p1226 = pneg %p1225
      $region94: #{tpu_custom_call.1} parent=5 // pred_check_branch
        %1228 = sbr.rel (%p1226) target = $region96
      $region95: #{tpu_custom_call.1} parent=5 // pred_region
        %s1229 = ssub.s32 %s30, 2
        // Predicated region
        $region97: #{tpu_custom_call.1} parent=95 // pred_check
          %p1230 = pneg %p383
        $region98: #{tpu_custom_call.1} parent=95 // pred_check_branch
          %1232 = sbr.rel (%p1230) target = $region100
        $region99: #{tpu_custom_call.1} parent=95 // pred_region
          %s1233 = sand.u32 %s368, 1
          %s1234 = scalar_lea.sflag [#allocation4], %s1233
          %s1235 = sand.u32 %s368, 1
          %s1236 = smul.addr %s1235, 8
          %s1237 = scalar_lea.vmem [#allocation10], %s1236
          %1239 = dma.done %s1234, 128
        $region100: #{tpu_custom_call.1} parent=95 // pred_fallthru
          _
      $region96: #{tpu_custom_call.1} parent=5 // pred_fallthru
        _
    $region6: #{tpu_custom_call.1} parent=1 // loop_footer
      %s34 = sadd.s32 1, %s30
    $region7: #{tpu_custom_call.1} parent=1 // loop_footer_branch
      %29 = sbr.rel target = $region3
    $region8: #{tpu_custom_call.1} parent=1 // loop_exit
      _
    %1240 = vsyncpa [#allocation3], 1
    %s1241 = scalar_lea.sflag [#allocation3], 1
    %1242 = vsyncpa %s1241, 1
    %1243 = vsyncpa [#allocation6], 1
    %s1244 = scalar_lea.sflag [#allocation6], 1
    %1245 = vsyncpa %s1244, 1
    %1246 = vsyncpa [#allocation9], 1
    %s1247 = scalar_lea.sflag [#allocation9], 1
    %1248 = vsyncpa %s1247, 1
    %1249 = vsyncpa [#allocation4], 1
    %s1250 = scalar_lea.sflag [#allocation4], 1
    %1251 = vsyncpa %s1250, 1

</llo_original>
